<compile_context>
chip_gen: v6e
topology: v6e:2x2x1
jax: 0.10.0
libtpu: 0.0.40
codegen_flags: <defaults>
</compile_context>

<pallas_src>
import functools
import math

import jax
import jax.numpy as jnp
from jax.experimental import pallas as pl
from jax.experimental.pallas import tpu as pltpu

D_MODEL = 32
NHEAD = 4
DIM_FF = 64
EPS = 1e-5


def _layer_norm(x, gamma, beta):
    mean = jnp.mean(x, axis=-1, keepdims=True)
    var = jnp.mean((x - mean) ** 2, axis=-1, keepdims=True)
    return (x - mean) * jax.lax.rsqrt(var + EPS) * gamma + beta


def _encoder_layer_kernel(src_ref, pos_ref, w_ref, vec_ref, out_ref, *, nhead, dim_ff):
    """One grid step = one batch element.  src_ref/pos_ref/out_ref: (L, D)."""
    L, D = src_ref.shape
    FF = dim_ff
    H = nhead
    dh = D // H
    scale = 1.0 / math.sqrt(dh)

    src = src_ref[...]                           # (L, D) value rows
    qk_in = src + pos_ref[...]                   # q = k = src + pos

    # ---- packed weight slab (resident across grid steps) ----
    w_in = w_ref[0:D, 0:3 * D]                   # (D, 3D)  fused in_proj weight (pre-T)
    wo = w_ref[D:2 * D, 0:D]                     # (D, D)   out_proj weight (pre-T)
    w1 = w_ref[D:2 * D, D:D + FF]                # (D, FF)
    w2 = w_ref[2 * D:2 * D + FF, 0:D]            # (FF, D)

    # ---- packed small-vector slab ----
    bq = vec_ref[0:1, 0:D]
    bk = vec_ref[1:2, 0:D]
    bv = vec_ref[2:3, 0:D]
    bo = vec_ref[3:4, 0:D]
    g1 = vec_ref[4:5, 0:D]
    be1 = vec_ref[5:6, 0:D]
    b1 = vec_ref[6:7, 0:FF]
    b2 = vec_ref[7:8, 0:D]
    g2 = vec_ref[8:9, 0:D]
    be2 = vec_ref[9:10, 0:D]

    # ---- fused q/k/v projection: one (2L, D) @ (D, 3D) MXU push ----
    x2 = jnp.concatenate([qk_in, src], axis=0)                        # (2L, D)
    proj = jnp.dot(x2, w_in, preferred_element_type=jnp.float32)      # (2L, 3D)

    q = (proj[:L, 0:D] + bq) * scale                                  # (L, D)
    k = proj[:L, D:2 * D] + bk                                        # (L, D)
    v = proj[L:, 2 * D:3 * D] + bv                                    # (L, D)

    # ---- head-batched attention (no per-head matmul loop, no mask) ----
    qh = jnp.stack([q[:, h * dh:(h + 1) * dh] for h in range(H)], axis=0)  # (H, L, dh)
    kh = jnp.stack([k[:, h * dh:(h + 1) * dh] for h in range(H)], axis=0)
    vh = jnp.stack([v[:, h * dh:(h + 1) * dh] for h in range(H)], axis=0)

    s = jnp.einsum('hqd,hkd->hqk', qh, kh,
                   preferred_element_type=jnp.float32)                # (H, L, L)
    s = s - jnp.max(s, axis=-1, keepdims=True)
    p = jnp.exp(s)
    p = p / jnp.sum(p, axis=-1, keepdims=True)                        # exact divide
    o = jnp.einsum('hqk,hkd->hqd', p, vh,
                   preferred_element_type=jnp.float32)                # (H, L, dh)

    attn = jnp.concatenate([o[h] for h in range(H)], axis=1)          # (L, D)
    attn = jnp.dot(attn, wo, preferred_element_type=jnp.float32) + bo

    # ---- residual + LayerNorm 1 (dropout1 == identity) ----
    x1 = _layer_norm(src + attn, g1, be1)

    # ---- feed-forward: linear1 -> relu -> linear2 (dropout == identity) ----
    h1 = jnp.maximum(jnp.dot(x1, w1, preferred_element_type=jnp.float32) + b1, 0.0)
    h2 = jnp.dot(h1, w2, preferred_element_type=jnp.float32) + b2

    # ---- residual + LayerNorm 2 (dropout2 == identity) ----
    out_ref[...] = _layer_norm(x1 + h2, g2, be2)


def pack_params(params):
    """One-time packing: all weights into one slab, all small vectors into another."""
    D, FF = D_MODEL, DIM_FF
    wqkv = params["in_proj_w"]                    # (3D, D) PyTorch in_proj_weight

    n_rows = 2 * D + FF                           # 128
    n_cols = ((max(3 * D, D + FF) + 127) // 128) * 128   # 128
    W = jnp.zeros((n_rows, n_cols), jnp.float32)
    W = W.at[0:D, 0:3 * D].set(wqkv.T)            # fused in_proj, (K, N) layout
    W = W.at[D:2 * D, 0:D].set(params["out_proj_w"].T)
    W = W.at[D:2 * D, D:D + FF].set(params["w1"].T)
    W = W.at[2 * D:2 * D + FF, 0:D].set(params["w2"].T)

    b_in = params["in_proj_b"][0]                 # (3D,)
    V = jnp.zeros((16, 128), jnp.float32)
    V = V.at[0, 0:D].set(b_in[0:D])               # bq
    V = V.at[1, 0:D].set(b_in[D:2 * D])           # bk
    V = V.at[2, 0:D].set(b_in[2 * D:3 * D])       # bv
    V = V.at[3, 0:D].set(params["out_proj_b"][0])
    V = V.at[4, 0:D].set(params["ln1_g"][0])
    V = V.at[5, 0:D].set(params["ln1_b"][0])
    V = V.at[6, 0:FF].set(params["b1"][0])
    V = V.at[7, 0:D].set(params["b2"][0])
    V = V.at[8, 0:D].set(params["ln2_g"][0])
    V = V.at[9, 0:D].set(params["ln2_b"][0])
    return W, V


def transformer_encoder_layer(src, pos, packed_params):
    """src, pos: (L, B, D) float32 — PyTorch seq-first convention."""
    W, V = packed_params
    L, B, D = src.shape

    # Batch-major layout so each grid step owns a contiguous (L, D) slab — no
    # cross-batch scores, no (N, N) mask.
    src_b = jnp.transpose(src, (1, 0, 2))         # (B, L, D)
    pos_b = jnp.transpose(pos, (1, 0, 2))

    kernel = functools.partial(_encoder_layer_kernel, nhead=NHEAD, dim_ff=DIM_FF)
    out_b = pl.pallas_call(
        kernel,
        out_shape=jax.ShapeDtypeStruct((B, L, D), jnp.float32),
        grid=(B,),
        in_specs=[
            pl.BlockSpec((None, L, D), lambda b: (b, 0, 0)),   # src (per-batch tile)
            pl.BlockSpec((None, L, D), lambda b: (b, 0, 0)),   # pos (per-batch tile)
            pl.BlockSpec(W.shape, lambda b: (0, 0)),           # weight slab (resident)
            pl.BlockSpec(V.shape, lambda b: (0, 0)),           # vector slab (resident)
        ],
        out_specs=pl.BlockSpec((None, L, D), lambda b: (b, 0, 0)),
        compiler_params=pltpu.CompilerParams(
            dimension_semantics=("parallel",),                 # 2 TCs on v7x
            vmem_limit_bytes=32 * 1024 * 1024,
        ),
    )(src_b, pos_b, W, V)

    return jnp.transpose(out_b, (1, 0, 2))        # back to (L, B, D)


def reference_encoder_layer(src, pos, params):
    """Pure-JAX reference (mirrors PyTorch nn.MultiheadAttention, eval mode)."""
    L, B, D = src.shape
    H, dh = NHEAD, D // NHEAD
    scale = 1.0 / math.sqrt(dh)

    qk_in = src + pos
    wqkv, bqkv = params["in_proj_w"], params["in_proj_b"][0]
    q = qk_in @ wqkv[0:D].T + bqkv[0:D]
    k = qk_in @ wqkv[D:2 * D].T + bqkv[D:2 * D]
    v = src @ wqkv[2 * D:].T + bqkv[2 * D:]

    def split_heads(t):  # (L, B, D) -> (B, H, L, dh)
        return jnp.transpose(t.reshape(L, B, H, dh), (1, 2, 0, 3))

    qh, kh, vh = split_heads(q) * scale, split_heads(k), split_heads(v)
    s = jnp.einsum("bhqd,bhkd->bhqk", qh, kh)
    p = jax.nn.softmax(s, axis=-1)
    o = jnp.einsum("bhqk,bhkd->bhqd", p, vh)
    o = jnp.transpose(o, (2, 0, 1, 3)).reshape(L, B, D)
    attn = o @ params["out_proj_w"].T + params["out_proj_b"][0]

    def ln(x, g, b):
        mu = x.mean(-1, keepdims=True)
        var = ((x - mu) ** 2).mean(-1, keepdims=True)
        return (x - mu) / jnp.sqrt(var + EPS) * g[0] + b[0]

    x = ln(src + attn, params["ln1_g"], params["ln1_b"])
    h1 = jnp.maximum(x @ params["w1"].T + params["b1"][0], 0.0)
    h2 = h1 @ params["w2"].T + params["b2"][0]
    return ln(x + h2, params["ln2_g"], params["ln2_b"])


def make_params(key):
    ks = jax.random.split(key, 6)
    std = 0.05
    return {
        "in_proj_w": std * jax.random.normal(ks[0], (3 * D_MODEL, D_MODEL), jnp.float32),
        "in_proj_b": jnp.zeros((1, 3 * D_MODEL), jnp.float32),
        "out_proj_w": std * jax.random.normal(ks[1], (D_MODEL, D_MODEL), jnp.float32),
        "out_proj_b": jnp.zeros((1, D_MODEL), jnp.float32),
        "ln1_g": jnp.ones((1, D_MODEL), jnp.float32),
        "ln1_b": jnp.zeros((1, D_MODEL), jnp.float32),
        "w1": std * jax.random.normal(ks[2], (DIM_FF, D_MODEL), jnp.float32),
        "b1": 0.01 * jnp.ones((1, DIM_FF), jnp.float32),
        "w2": std * jax.random.normal(ks[3], (D_MODEL, DIM_FF), jnp.float32),
        "b2": 0.01 * jnp.ones((1, D_MODEL), jnp.float32),
        "ln2_g": jnp.ones((1, D_MODEL), jnp.float32),
        "ln2_b": jnp.zeros((1, D_MODEL), jnp.float32),
    }


if __name__ == "__main__":
    key = jax.random.PRNGKey(0)
    k_src, k_pos, k_par = jax.random.split(key, 3)

    L, B = 8, 2                                   # seq len, batch
    src = jax.random.normal(k_src, (L, B, D_MODEL), jnp.float32)
    pos = jax.random.normal(k_pos, (L, B, D_MODEL), jnp.float32)
    params = make_params(k_par)

    # Weight transposes / packing hoisted out of the per-call path (done once).
    packed = pack_params(params)
    packed = jax.block_until_ready(packed)

    out = transformer_encoder_layer(src, pos, packed)
    out = jax.block_until_ready(out)

    ref = reference_encoder_layer(src, pos, params)
    assert out.shape == (L, B, D_MODEL)
    assert jnp.allclose(out, ref, atol=1e-3, rtol=1e-3), \
        f"max abs diff {jnp.max(jnp.abs(out - ref))}"

    print("KERNEL_OK")
</pallas_src>

<mosaic_0001>
module attributes {stable_mosaic.version = 11 : i64} {
  func.func @_encoder_layer_kernel(%arg0: i32, %arg1: memref<1x8x32xf32, #tpu.memory_space<vmem>>, %arg2: memref<1x8x32xf32, #tpu.memory_space<vmem>>, %arg3: memref<128x128xf32, #tpu.memory_space<vmem>>, %arg4: memref<16x128xf32, #tpu.memory_space<vmem>>, %arg5: memref<1x8x32xf32, #tpu.memory_space<vmem>>) attributes {dimension_semantics = [#tpu.dimension_semantics<parallel>], iteration_bounds = array<i64: 2>, scalar_prefetch = 0 : i64, scratch_operands = 0 : i64, tpu.core_type = #tpu.core_type<tc>, window_params = [{transform_indices = @transform_0, window_bounds = array<i64: 1, 8, 32>}, {transform_indices = @transform_1, window_bounds = array<i64: 1, 8, 32>}, {pipeline_mode = #tpu.pipeline_mode<synchronous>, transform_indices = @transform_2, window_bounds = array<i64: 128, 128>}, {pipeline_mode = #tpu.pipeline_mode<synchronous>, transform_indices = @transform_3, window_bounds = array<i64: 16, 128>}, {transform_indices = @transform_4, window_bounds = array<i64: 1, 8, 32>}]} {
    %c0 = arith.constant 0 : index
    %c0_0 = arith.constant 0 : index
    %c0_1 = arith.constant 0 : index
    %0 = vector.load %arg1[%c0, %c0_0, %c0_1] : memref<1x8x32xf32, #tpu.memory_space<vmem>>, vector<1x8x32xf32>
    %1 = vector.shape_cast %0 : vector<1x8x32xf32> to vector<8x32xf32>
    %c0_2 = arith.constant 0 : index
    %c0_3 = arith.constant 0 : index
    %c0_4 = arith.constant 0 : index
    %2 = vector.load %arg2[%c0_2, %c0_3, %c0_4] : memref<1x8x32xf32, #tpu.memory_space<vmem>>, vector<1x8x32xf32>
    %3 = vector.shape_cast %2 : vector<1x8x32xf32> to vector<8x32xf32>
    %4 = arith.addf %1, %3 : vector<8x32xf32>
    %c0_5 = arith.constant 0 : index
    %c0_6 = arith.constant 0 : index
    %5 = vector.load %arg3[%c0_5, %c0_6] : memref<128x128xf32, #tpu.memory_space<vmem>>, vector<32x96xf32>
    %c32 = arith.constant 32 : index
    %c0_7 = arith.constant 0 : index
    %6 = vector.load %arg3[%c32, %c0_7] : memref<128x128xf32, #tpu.memory_space<vmem>>, vector<32x32xf32>
    %c32_8 = arith.constant 32 : index
    %c32_9 = arith.constant 32 : index
    %7 = vector.load %arg3[%c32_8, %c32_9] : memref<128x128xf32, #tpu.memory_space<vmem>>, vector<32x64xf32>
    %c64 = arith.constant 64 : index
    %c0_10 = arith.constant 0 : index
    %8 = vector.load %arg3[%c64, %c0_10] : memref<128x128xf32, #tpu.memory_space<vmem>>, vector<64x32xf32>
    %c0_11 = arith.constant 0 : index
    %c0_12 = arith.constant 0 : index
    %9 = vector.load %arg4[%c0_11, %c0_12] : memref<16x128xf32, #tpu.memory_space<vmem>>, vector<1x32xf32>
    %c1 = arith.constant 1 : index
    %c0_13 = arith.constant 0 : index
    %10 = vector.load %arg4[%c1, %c0_13] : memref<16x128xf32, #tpu.memory_space<vmem>>, vector<1x32xf32>
    %c2 = arith.constant 2 : index
    %c0_14 = arith.constant 0 : index
    %11 = vector.load %arg4[%c2, %c0_14] : memref<16x128xf32, #tpu.memory_space<vmem>>, vector<1x32xf32>
    %c3 = arith.constant 3 : index
    %c0_15 = arith.constant 0 : index
    %12 = vector.load %arg4[%c3, %c0_15] : memref<16x128xf32, #tpu.memory_space<vmem>>, vector<1x32xf32>
    %c4 = arith.constant 4 : index
    %c0_16 = arith.constant 0 : index
    %13 = vector.load %arg4[%c4, %c0_16] : memref<16x128xf32, #tpu.memory_space<vmem>>, vector<1x32xf32>
    %c5 = arith.constant 5 : index
    %c0_17 = arith.constant 0 : index
    %14 = vector.load %arg4[%c5, %c0_17] : memref<16x128xf32, #tpu.memory_space<vmem>>, vector<1x32xf32>
    %c6 = arith.constant 6 : index
    %c0_18 = arith.constant 0 : index
    %15 = vector.load %arg4[%c6, %c0_18] : memref<16x128xf32, #tpu.memory_space<vmem>>, vector<1x64xf32>
    %c7 = arith.constant 7 : index
    %c0_19 = arith.constant 0 : index
    %16 = vector.load %arg4[%c7, %c0_19] : memref<16x128xf32, #tpu.memory_space<vmem>>, vector<1x32xf32>
    %c8 = arith.constant 8 : index
    %c0_20 = arith.constant 0 : index
    %17 = vector.load %arg4[%c8, %c0_20] : memref<16x128xf32, #tpu.memory_space<vmem>>, vector<1x32xf32>
    %c9 = arith.constant 9 : index
    %c0_21 = arith.constant 0 : index
    %18 = vector.load %arg4[%c9, %c0_21] : memref<16x128xf32, #tpu.memory_space<vmem>>, vector<1x32xf32>
    %19 = tpu.concatenate %4, %1 in 0 : vector<8x32xf32>, vector<8x32xf32> -> vector<16x32xf32>
    %cst = arith.constant dense<0.000000e+00> : vector<16x96xf32>
    %20 = tpu.matmul %19, %5, %cst {dimension_numbers = #tpu.dot_dimension_numbers<[1], [0], [0], [1], [0, 0, 1, 1], [], []>} : vector<16x32xf32>, vector<32x96xf32>, vector<16x96xf32> -> vector<16x96xf32>
    %21 = vector.extract_strided_slice %20 {offsets = [0, 0], sizes = [8, 32], strides = [1, 1]} : vector<16x96xf32> to vector<8x32xf32>
    %22 = vector.broadcast %9 : vector<1x32xf32> to vector<8x32xf32>
    %23 = arith.addf %21, %22 : vector<8x32xf32>
    %cst_22 = arith.constant 0.353553385 : f32
    %24 = vector.broadcast %cst_22 : f32 to vector<8x32xf32>
    %25 = arith.mulf %23, %24 : vector<8x32xf32>
    %26 = vector.extract_strided_slice %20 {offsets = [0, 32], sizes = [8, 32], strides = [1, 1]} : vector<16x96xf32> to vector<8x32xf32>
    %27 = vector.broadcast %10 : vector<1x32xf32> to vector<8x32xf32>
    %28 = arith.addf %26, %27 : vector<8x32xf32>
    %29 = vector.extract_strided_slice %20 {offsets = [8, 64], sizes = [8, 32], strides = [1, 1]} : vector<16x96xf32> to vector<8x32xf32>
    %30 = vector.broadcast %11 : vector<1x32xf32> to vector<8x32xf32>
    %31 = arith.addf %29, %30 : vector<8x32xf32>
    %32 = vector.extract_strided_slice %25 {offsets = [0, 0], sizes = [8, 8], strides = [1, 1]} : vector<8x32xf32> to vector<8x8xf32>
    %33 = vector.extract_strided_slice %25 {offsets = [0, 8], sizes = [8, 8], strides = [1, 1]} : vector<8x32xf32> to vector<8x8xf32>
    %34 = vector.extract_strided_slice %25 {offsets = [0, 16], sizes = [8, 8], strides = [1, 1]} : vector<8x32xf32> to vector<8x8xf32>
    %35 = vector.extract_strided_slice %25 {offsets = [0, 24], sizes = [8, 8], strides = [1, 1]} : vector<8x32xf32> to vector<8x8xf32>
    %36 = vector.shape_cast %32 : vector<8x8xf32> to vector<1x8x8xf32>
    %37 = vector.shape_cast %33 : vector<8x8xf32> to vector<1x8x8xf32>
    %38 = vector.shape_cast %34 : vector<8x8xf32> to vector<1x8x8xf32>
    %39 = vector.shape_cast %35 : vector<8x8xf32> to vector<1x8x8xf32>
    %40 = tpu.concatenate %36, %37, %38, %39 in 0 : vector<1x8x8xf32>, vector<1x8x8xf32>, vector<1x8x8xf32>, vector<1x8x8xf32> -> vector<4x8x8xf32>
    %41 = vector.extract_strided_slice %28 {offsets = [0, 0], sizes = [8, 8], strides = [1, 1]} : vector<8x32xf32> to vector<8x8xf32>
    %42 = vector.extract_strided_slice %28 {offsets = [0, 8], sizes = [8, 8], strides = [1, 1]} : vector<8x32xf32> to vector<8x8xf32>
    %43 = vector.extract_strided_slice %28 {offsets = [0, 16], sizes = [8, 8], strides = [1, 1]} : vector<8x32xf32> to vector<8x8xf32>
    %44 = vector.extract_strided_slice %28 {offsets = [0, 24], sizes = [8, 8], strides = [1, 1]} : vector<8x32xf32> to vector<8x8xf32>
    %45 = vector.shape_cast %41 : vector<8x8xf32> to vector<1x8x8xf32>
    %46 = vector.shape_cast %42 : vector<8x8xf32> to vector<1x8x8xf32>
    %47 = vector.shape_cast %43 : vector<8x8xf32> to vector<1x8x8xf32>
    %48 = vector.shape_cast %44 : vector<8x8xf32> to vector<1x8x8xf32>
    %49 = tpu.concatenate %45, %46, %47, %48 in 0 : vector<1x8x8xf32>, vector<1x8x8xf32>, vector<1x8x8xf32>, vector<1x8x8xf32> -> vector<4x8x8xf32>
    %50 = vector.extract_strided_slice %31 {offsets = [0, 0], sizes = [8, 8], strides = [1, 1]} : vector<8x32xf32> to vector<8x8xf32>
    %51 = vector.extract_strided_slice %31 {offsets = [0, 8], sizes = [8, 8], strides = [1, 1]} : vector<8x32xf32> to vector<8x8xf32>
    %52 = vector.extract_strided_slice %31 {offsets = [0, 16], sizes = [8, 8], strides = [1, 1]} : vector<8x32xf32> to vector<8x8xf32>
    %53 = vector.extract_strided_slice %31 {offsets = [0, 24], sizes = [8, 8], strides = [1, 1]} : vector<8x32xf32> to vector<8x8xf32>
    %54 = vector.shape_cast %50 : vector<8x8xf32> to vector<1x8x8xf32>
    %55 = vector.shape_cast %51 : vector<8x8xf32> to vector<1x8x8xf32>
    %56 = vector.shape_cast %52 : vector<8x8xf32> to vector<1x8x8xf32>
    %57 = vector.shape_cast %53 : vector<8x8xf32> to vector<1x8x8xf32>
    %58 = tpu.concatenate %54, %55, %56, %57 in 0 : vector<1x8x8xf32>, vector<1x8x8xf32>, vector<1x8x8xf32>, vector<1x8x8xf32> -> vector<4x8x8xf32>
    "tpu.trace_start"() <{level = 10 : i32, message = "hqd,hkd->hqk"}> : () -> ()
    %cst_23 = arith.constant dense<0.000000e+00> : vector<4x8x8xf32>
    %59 = tpu.matmul %40, %49, %cst_23 {dimension_numbers = #tpu.dot_dimension_numbers<[2], [2], [1], [1], [0, 0, 0, 1, 1, 1], [0], [0]>} : vector<4x8x8xf32>, vector<4x8x8xf32>, vector<4x8x8xf32> -> vector<4x8x8xf32>
    "tpu.trace_stop"() : () -> ()
    %cst_24 = arith.constant dense<0xFF800000> : vector<4x8xf32>
    %60 = vector.multi_reduction <maximumf>, %59, %cst_24 [2] : vector<4x8x8xf32> to vector<4x8xf32>
    %61 = vector.shape_cast %60 : vector<4x8xf32> to vector<4x8x1xf32>
    %62 = vector.broadcast %61 : vector<4x8x1xf32> to vector<4x8x8xf32>
    %63 = arith.subf %59, %62 : vector<4x8x8xf32>
    %64 = math.exp %63 : vector<4x8x8xf32>
    %cst_25 = arith.constant dense<0.000000e+00> : vector<4x8xf32>
    %65 = vector.multi_reduction <add>, %64, %cst_25 [2] : vector<4x8x8xf32> to vector<4x8xf32>
    %66 = vector.shape_cast %65 : vector<4x8xf32> to vector<4x8x1xf32>
    %67 = vector.broadcast %66 : vector<4x8x1xf32> to vector<4x8x8xf32>
    %68 = arith.divf %64, %67 : vector<4x8x8xf32>
    "tpu.trace_start"() <{level = 10 : i32, message = "hqk,hkd->hqd"}> : () -> ()
    %cst_26 = arith.constant dense<0.000000e+00> : vector<4x8x8xf32>
    %69 = tpu.matmul %68, %58, %cst_26 {dimension_numbers = #tpu.dot_dimension_numbers<[2], [1], [1], [2], [0, 0, 0, 1, 1, 2], [0], [0]>} : vector<4x8x8xf32>, vector<4x8x8xf32>, vector<4x8x8xf32> -> vector<4x8x8xf32>
    "tpu.trace_stop"() : () -> ()
    %70 = vector.extract_strided_slice %69 {offsets = [0, 0, 0], sizes = [1, 8, 8], strides = [1, 1, 1]} : vector<4x8x8xf32> to vector<1x8x8xf32>
    %71 = vector.shape_cast %70 : vector<1x8x8xf32> to vector<8x8xf32>
    %72 = vector.extract_strided_slice %69 {offsets = [1, 0, 0], sizes = [1, 8, 8], strides = [1, 1, 1]} : vector<4x8x8xf32> to vector<1x8x8xf32>
    %73 = vector.shape_cast %72 : vector<1x8x8xf32> to vector<8x8xf32>
    %74 = vector.extract_strided_slice %69 {offsets = [2, 0, 0], sizes = [1, 8, 8], strides = [1, 1, 1]} : vector<4x8x8xf32> to vector<1x8x8xf32>
    %75 = vector.shape_cast %74 : vector<1x8x8xf32> to vector<8x8xf32>
    %76 = vector.extract_strided_slice %69 {offsets = [3, 0, 0], sizes = [1, 8, 8], strides = [1, 1, 1]} : vector<4x8x8xf32> to vector<1x8x8xf32>
    %77 = vector.shape_cast %76 : vector<1x8x8xf32> to vector<8x8xf32>
    %78 = tpu.concatenate %71, %73, %75, %77 in 1 : vector<8x8xf32>, vector<8x8xf32>, vector<8x8xf32>, vector<8x8xf32> -> vector<8x32xf32>
    %cst_27 = arith.constant dense<0.000000e+00> : vector<8x32xf32>
    %79 = tpu.matmul %78, %6, %cst_27 {dimension_numbers = #tpu.dot_dimension_numbers<[1], [0], [0], [1], [0, 0, 1, 1], [], []>} : vector<8x32xf32>, vector<32x32xf32>, vector<8x32xf32> -> vector<8x32xf32>
    %80 = vector.broadcast %12 : vector<1x32xf32> to vector<8x32xf32>
    %81 = arith.addf %79, %80 : vector<8x32xf32>
    %82 = arith.addf %1, %81 : vector<8x32xf32>
    %cst_28 = arith.constant dense<0.000000e+00> : vector<8xf32>
    %83 = vector.multi_reduction <add>, %82, %cst_28 [1] : vector<8x32xf32> to vector<8xf32>
    %84 = vector.shape_cast %83 : vector<8xf32> to vector<8x1xf32>
    %cst_29 = arith.constant 3.200000e+01 : f32
    %85 = vector.broadcast %cst_29 : f32 to vector<8x1xf32>
    %86 = arith.divf %84, %85 : vector<8x1xf32>
    %87 = vector.broadcast %86 : vector<8x1xf32> to vector<8x32xf32>
    %88 = arith.subf %82, %87 : vector<8x32xf32>
    %89 = arith.mulf %88, %88 : vector<8x32xf32>
    %cst_30 = arith.constant dense<0.000000e+00> : vector<8xf32>
    %90 = vector.multi_reduction <add>, %89, %cst_30 [1] : vector<8x32xf32> to vector<8xf32>
    %91 = vector.shape_cast %90 : vector<8xf32> to vector<8x1xf32>
    %cst_31 = arith.constant 3.200000e+01 : f32
    %92 = vector.broadcast %cst_31 : f32 to vector<8x1xf32>
    %93 = arith.divf %91, %92 : vector<8x1xf32>
    %94 = vector.broadcast %86 : vector<8x1xf32> to vector<8x32xf32>
    %95 = arith.subf %82, %94 : vector<8x32xf32>
    %cst_32 = arith.constant 9.99999974E-6 : f32
    %96 = vector.broadcast %cst_32 : f32 to vector<8x1xf32>
    %97 = arith.addf %93, %96 : vector<8x1xf32>
    %98 = math.rsqrt %97 : vector<8x1xf32>
    %99 = vector.broadcast %98 : vector<8x1xf32> to vector<8x32xf32>
    %100 = arith.mulf %95, %99 : vector<8x32xf32>
    %101 = vector.broadcast %13 : vector<1x32xf32> to vector<8x32xf32>
    %102 = arith.mulf %100, %101 : vector<8x32xf32>
    %103 = vector.broadcast %14 : vector<1x32xf32> to vector<8x32xf32>
    %104 = arith.addf %102, %103 : vector<8x32xf32>
    %cst_33 = arith.constant dense<0.000000e+00> : vector<8x64xf32>
    %105 = tpu.matmul %104, %7, %cst_33 {dimension_numbers = #tpu.dot_dimension_numbers<[1], [0], [0], [1], [0, 0, 1, 1], [], []>} : vector<8x32xf32>, vector<32x64xf32>, vector<8x64xf32> -> vector<8x64xf32>
    %106 = vector.broadcast %15 : vector<1x64xf32> to vector<8x64xf32>
    %107 = arith.addf %105, %106 : vector<8x64xf32>
    %cst_34 = arith.constant 0.000000e+00 : f32
    %108 = vector.broadcast %cst_34 : f32 to vector<8x64xf32>
    %109 = arith.maximumf %107, %108 : vector<8x64xf32>
    %cst_35 = arith.constant dense<0.000000e+00> : vector<8x32xf32>
    %110 = tpu.matmul %109, %8, %cst_35 {dimension_numbers = #tpu.dot_dimension_numbers<[1], [0], [0], [1], [0, 0, 1, 1], [], []>} : vector<8x64xf32>, vector<64x32xf32>, vector<8x32xf32> -> vector<8x32xf32>
    %111 = vector.broadcast %16 : vector<1x32xf32> to vector<8x32xf32>
    %112 = arith.addf %110, %111 : vector<8x32xf32>
    %113 = arith.addf %104, %112 : vector<8x32xf32>
    %cst_36 = arith.constant dense<0.000000e+00> : vector<8xf32>
    %114 = vector.multi_reduction <add>, %113, %cst_36 [1] : vector<8x32xf32> to vector<8xf32>
    %115 = vector.shape_cast %114 : vector<8xf32> to vector<8x1xf32>
    %cst_37 = arith.constant 3.200000e+01 : f32
    %116 = vector.broadcast %cst_37 : f32 to vector<8x1xf32>
    %117 = arith.divf %115, %116 : vector<8x1xf32>
    %118 = vector.broadcast %117 : vector<8x1xf32> to vector<8x32xf32>
    %119 = arith.subf %113, %118 : vector<8x32xf32>
    %120 = arith.mulf %119, %119 : vector<8x32xf32>
    %cst_38 = arith.constant dense<0.000000e+00> : vector<8xf32>
    %121 = vector.multi_reduction <add>, %120, %cst_38 [1] : vector<8x32xf32> to vector<8xf32>
    %122 = vector.shape_cast %121 : vector<8xf32> to vector<8x1xf32>
    %cst_39 = arith.constant 3.200000e+01 : f32
    %123 = vector.broadcast %cst_39 : f32 to vector<8x1xf32>
    %124 = arith.divf %122, %123 : vector<8x1xf32>
    %125 = vector.broadcast %117 : vector<8x1xf32> to vector<8x32xf32>
    %126 = arith.subf %113, %125 : vector<8x32xf32>
    %cst_40 = arith.constant 9.99999974E-6 : f32
    %127 = vector.broadcast %cst_40 : f32 to vector<8x1xf32>
    %128 = arith.addf %124, %127 : vector<8x1xf32>
    %129 = math.rsqrt %128 : vector<8x1xf32>
    %130 = vector.broadcast %129 : vector<8x1xf32> to vector<8x32xf32>
    %131 = arith.mulf %126, %130 : vector<8x32xf32>
    %132 = vector.broadcast %17 : vector<1x32xf32> to vector<8x32xf32>
    %133 = arith.mulf %131, %132 : vector<8x32xf32>
    %134 = vector.broadcast %18 : vector<1x32xf32> to vector<8x32xf32>
    %135 = arith.addf %133, %134 : vector<8x32xf32>
    %c0_41 = arith.constant 0 : index
    %c0_42 = arith.constant 0 : index
    %c0_43 = arith.constant 0 : index
    %136 = vector.load %arg5[%c0_41, %c0_42, %c0_43] : memref<1x8x32xf32, #tpu.memory_space<vmem>>, vector<1x8x32xf32>
    %137 = vector.shape_cast %136 : vector<1x8x32xf32> to vector<8x32xf32>
    %138 = vector.shape_cast %135 : vector<8x32xf32> to vector<1x8x32xf32>
    tpu.vector_store %arg5[%c0_41, %c0_42, %c0_43], %138 {strides = array<i32>} : memref<1x8x32xf32, #tpu.memory_space<vmem>>, vector<1x8x32xf32>,
    return
  }
  func.func @transform_0(%arg0: i32) -> (i32, i32, i32) {
    %c0_i32 = arith.constant 0 : i32
    %c0_i32_0 = arith.constant 0 : i32
    %c0_i32_1 = arith.constant 0 : i32
    return %arg0, %c0_i32, %c0_i32_0 : i32, i32, i32
  }
  func.func @transform_1(%arg0: i32) -> (i32, i32, i32) {
    %c0_i32 = arith.constant 0 : i32
    %c0_i32_0 = arith.constant 0 : i32
    %c0_i32_1 = arith.constant 0 : i32
    return %arg0, %c0_i32, %c0_i32_0 : i32, i32, i32
  }
  func.func @transform_2(%arg0: i32) -> (i32, i32) {
    %c0_i32 = arith.constant 0 : i32
    %c0_i32_0 = arith.constant 0 : i32
    %c0_i32_1 = arith.constant 0 : i32
    return %c0_i32, %c0_i32_0 : i32, i32
  }
  func.func @transform_3(%arg0: i32) -> (i32, i32) {
    %c0_i32 = arith.constant 0 : i32
    %c0_i32_0 = arith.constant 0 : i32
    %c0_i32_1 = arith.constant 0 : i32
    return %c0_i32, %c0_i32_0 : i32, i32
  }
  func.func @transform_4(%arg0: i32) -> (i32, i32, i32) {
    %c0_i32 = arith.constant 0 : i32
    %c0_i32_0 = arith.constant 0 : i32
    %c0_i32_1 = arith.constant 0 : i32
    return %arg0, %c0_i32, %c0_i32_0 : i32, i32, i32
  }
}

</mosaic_0001>

<llo_original>
// kernel: tpu_custom_call.1
$region0: #{tpu_custom_call.1}
  #allocation0 [shape = 'u32[]', space=smem, size = 0x4, offset = 0x4, fixed_abs, tag = 'smem constant byte address 0x4 - core index']
  #allocation1 [shape = 'u32[144,128]{1,0:T(1,128)}', space=vmem, size = 0x12000, scoped, tag = 'internal scratch']
  %s0 = inlined_call_operand.hbm [shape: f32[2,8,32], index: 0, kind: input, shape index: {}]
  %s1 = inlined_call_operand.hbm [shape: f32[2,8,32], index: 1, kind: input, shape index: {}]
  %s2 = inlined_call_operand.hbm [shape: f32[128,128], index: 2, kind: input, shape index: {}]
  %s3 = inlined_call_operand.hbm [shape: f32[16,128], index: 3, kind: input, shape index: {}]
  %s4 = inlined_call_operand.hbm [shape: f32[2,8,32], index: 4, kind: output, shape index: {}]
  %s5 = sld [smem:[#allocation0]]
  $region65: #{tpu_custom_call.1} parent=0
    _
  %s7 = ssub.s32 1, %s5
  %s8 = scalar_select 0, %s7, %s5
  $region1: #{tpu_custom_call.1} parent=0
    #allocation2 [shape = 'u8[8192]{0}', space=vmem, size = 0x2000, scoped, tag = 'input window, operand 0']
    #allocation3 [shape = 's32[2]{0}', space=sflag, size = 0x8, scoped, tag = 'scoped memory for tpu_custom_call.1']
    #allocation4 [shape = 's32[2]{0}', space=sflag, size = 0x8, scoped, tag = 'scoped memory for tpu_custom_call.1']
    #allocation5 [shape = 'u8[8192]{0}', space=vmem, size = 0x2000, scoped, tag = 'input window, operand 1']
    #allocation6 [shape = 's32[2]{0}', space=sflag, size = 0x8, scoped, tag = 'scoped memory for tpu_custom_call.1']
    #allocation7 [shape = 'u8[65536]{0}', space=vmem, size = 0x10000, scoped, tag = 'input window, operand 2, single buffered']
    #allocation8 [shape = 'u8[8192]{0}', space=vmem, size = 0x2000, scoped, tag = 'input window, operand 3, single buffered']
    #allocation9 [shape = 's32[1]{0}', space=sflag, size = 0x4, scoped, tag = 'scoped memory for tpu_custom_call.1']
    #allocation10 [shape = 'u8[8192]{0}', space=vmem, size = 0x2000, scoped, tag = 'output window, operand 0']
    %9 = vsyncpa [#allocation3], 0
    %s10 = scalar_lea.sflag [#allocation3], 1
    %11 = vsyncpa %s10, 0
    %12 = vsyncpa [#allocation6], 0
    %s13 = scalar_lea.sflag [#allocation6], 1
    %14 = vsyncpa %s13, 0
    %15 = vsyncpa [#allocation9], 0
    %16 = vsyncpa [#allocation4], 0
    %s17 = scalar_lea.sflag [#allocation4], 1
    %18 = vsyncpa %s17, 0
    loop: start=0, step=1, limit=4
    $region2: #{tpu_custom_call.1} parent=1 // loop_pre_header
      _
    $region3: #{tpu_custom_call.1} parent=1 // loop_header
      %s20 = sphi 0, %s24
      %p21 = scmp.ge.s32.totalorder %s20, 4
      %s30 = sphi 0, %s32
      %s33 = sphi 0, %s30
      %s34 = sphi 0, %s33
      %s50 = sphi 0, %s34
      %s56 = sphi 0, %s58
      %s59 = sphi 0, %s56
      %s60 = sphi 0, %s59
      %s76 = sphi 0, %s60
      %s80 = sphi 0, %s80
      %s82 = sphi 0, %s80
      %s83 = sphi 0, %s82
      %s97 = sphi 0, %s83
      %s101 = sphi 0, %s101
      %s103 = sphi 0, %s101
      %s104 = sphi 0, %s103
      %s118 = sphi 0, %s104
      %s124 = sphi 0, %s126
      %s127 = sphi 0, %s124
      %s128 = sphi 0, %s127
      %s144 = sphi 0, %s128
    $region4: #{tpu_custom_call.1} parent=1 // loop_header_branch
      %23 = sbr.rel (%p21) target = $region8
    $region5: #{tpu_custom_call.1} parent=1 // loop_body
      %s25 = ssub.s32 %s20, 1
      %s26 = ssub.s32 %s20, 2
      %s27 = sadd.s32 %s20, 1
      %s28 = ssub.s32 %s20, %s27
      %p29 = scmp.eq.s32.totalorder %s28, 0
      %s31 = sadd.s32 %s30, 1
      %s32 = scalar_select %p29, %s30, %s31
      %p35 = pneg %p29
      %p36 = scmp.eq.s32.totalorder %s20, 1
      %p37 = por %p35, %p36
      %p38 = scmp.ne.s32.totalorder %s30, %s33
      %p39 = scmp.eq.s32.totalorder %s20, 0
      %p40 = por %p38, %p39
      %p41 = scmp.ne.s32.totalorder %s30, %s33
      %p42 = scmp.eq.s32.totalorder %s25, 1
      %p43 = por %p41, %p42
      %p44 = scmp.ne.s32.totalorder %s33, %s34
      %p45 = scmp.eq.s32.totalorder %s25, 0
      %p46 = por %p44, %p45
      %p47 = scmp.ne.s32.totalorder %s33, %s34
      %p48 = scmp.eq.s32.totalorder %s26, 1
      %p49 = por %p47, %p48
      %p51 = scmp.ne.s32.totalorder %s34, %s50
      %p52 = scmp.eq.s32.totalorder %s26, 0
      %p53 = por %p51, %p52
      %s54 = ssub.s32 %s20, %s27
      %p55 = scmp.eq.s32.totalorder %s54, 0
      %s57 = sadd.s32 %s56, 1
      %s58 = scalar_select %p55, %s56, %s57
      %p61 = pneg %p55
      %p62 = scmp.eq.s32.totalorder %s20, 1
      %p63 = por %p61, %p62
      %p64 = scmp.ne.s32.totalorder %s56, %s59
      %p65 = scmp.eq.s32.totalorder %s20, 0
      %p66 = por %p64, %p65
      %p67 = scmp.ne.s32.totalorder %s56, %s59
      %p68 = scmp.eq.s32.totalorder %s25, 1
      %p69 = por %p67, %p68
      %p70 = scmp.ne.s32.totalorder %s59, %s60
      %p71 = scmp.eq.s32.totalorder %s25, 0
      %p72 = por %p70, %p71
      %p73 = scmp.ne.s32.totalorder %s59, %s60
      %p74 = scmp.eq.s32.totalorder %s26, 1
      %p75 = por %p73, %p74
      %p77 = scmp.ne.s32.totalorder %s60, %s76
      %p78 = scmp.eq.s32.totalorder %s26, 0
      %p79 = por %p77, %p78
      %s81 = sadd.s32 %s80, 1
      %p84 = scmp.eq.s32.totalorder %s20, 1
      %p85 = scmp.ne.s32.totalorder %s80, %s82
      %p86 = scmp.eq.s32.totalorder %s20, 0
      %p87 = por %p85, %p86
      %p88 = scmp.ne.s32.totalorder %s80, %s82
      %p89 = scmp.eq.s32.totalorder %s25, 1
      %p90 = por %p88, %p89
      %p91 = scmp.ne.s32.totalorder %s82, %s83
      %p92 = scmp.eq.s32.totalorder %s25, 0
      %p93 = por %p91, %p92
      %p94 = scmp.ne.s32.totalorder %s82, %s83
      %p95 = scmp.eq.s32.totalorder %s26, 1
      %p96 = por %p94, %p95
      %p98 = scmp.ne.s32.totalorder %s83, %s97
      %p99 = scmp.eq.s32.totalorder %s26, 0
      %p100 = por %p98, %p99
      %s102 = sadd.s32 %s101, 1
      %p105 = scmp.eq.s32.totalorder %s20, 1
      %p106 = scmp.ne.s32.totalorder %s101, %s103
      %p107 = scmp.eq.s32.totalorder %s20, 0
      %p108 = por %p106, %p107
      %p109 = scmp.ne.s32.totalorder %s101, %s103
      %p110 = scmp.eq.s32.totalorder %s25, 1
      %p111 = por %p109, %p110
      %p112 = scmp.ne.s32.totalorder %s103, %s104
      %p113 = scmp.eq.s32.totalorder %s25, 0
      %p114 = por %p112, %p113
      %p115 = scmp.ne.s32.totalorder %s103, %s104
      %p116 = scmp.eq.s32.totalorder %s26, 1
      %p117 = por %p115, %p116
      %p119 = scmp.ne.s32.totalorder %s104, %s118
      %p120 = scmp.eq.s32.totalorder %s26, 0
      %p121 = por %p119, %p120
      %s122 = ssub.s32 %s20, %s27
      %p123 = scmp.eq.s32.totalorder %s122, 0
      %s125 = sadd.s32 %s124, 1
      %s126 = scalar_select %p123, %s124, %s125
      %p129 = pneg %p123
      %p130 = scmp.eq.s32.totalorder %s20, 1
      %p131 = por %p129, %p130
      %p132 = scmp.ne.s32.totalorder %s124, %s127
      %p133 = scmp.eq.s32.totalorder %s20, 0
      %p134 = por %p132, %p133
      %p135 = scmp.ne.s32.totalorder %s124, %s127
      %p136 = scmp.eq.s32.totalorder %s25, 1
      %p137 = por %p135, %p136
      %p138 = scmp.ne.s32.totalorder %s127, %s128
      %p139 = scmp.eq.s32.totalorder %s25, 0
      %p140 = por %p138, %p139
      %p141 = scmp.ne.s32.totalorder %s127, %s128
      %p142 = scmp.eq.s32.totalorder %s26, 1
      %p143 = por %p141, %p142
      %p145 = scmp.ne.s32.totalorder %s128, %s144
      %p146 = scmp.eq.s32.totalorder %s26, 0
      %p147 = por %p145, %p146
      %p148 = scmp.le.s32.totalorder 1, %s20
      %p149 = scmp.lt.s32.totalorder %s20, 3
      %p150 = pnand %p148, %p149
      %p151 = pneg %p150
      // Predicated region
      $region9: #{tpu_custom_call.1} parent=5 // pred_check
        _
      $region10: #{tpu_custom_call.1} parent=5 // pred_check_branch
        %153 = sbr.rel (%p150) target = $region12
      $region11: #{tpu_custom_call.1} parent=5 // pred_region
        %s154 = ssub.s32 %s20, 1
        // Predicated region
        $region13: #{tpu_custom_call.1} parent=11 // pred_check
          %p155 = pneg %p93
        $region14: #{tpu_custom_call.1} parent=11 // pred_check_branch
          %157 = sbr.rel (%p155) target = $region16
        $region15: #{tpu_custom_call.1} parent=11 // pred_region
          %s159 = ssub.s32 2048, 2048
          %160 = vsyncadd [#allocation6], %s159
          %s161 = sshll.u32 [#allocation7], 4
          %s162 = int_to_ptr.vmem [resolvable:$true] %s161
          %167 = dma.hbm_to_vmem [thread:$0]  %s2, 2048, %s162, [#allocation6], 128, 128, 8
        $region16: #{tpu_custom_call.1} parent=11 // pred_fallthru
          _
        // Predicated region
        $region17: #{tpu_custom_call.1} parent=11 // pred_check
          %p168 = pneg %p114
        $region18: #{tpu_custom_call.1} parent=11 // pred_check_branch
          %170 = sbr.rel (%p168) target = $region20
        $region19: #{tpu_custom_call.1} parent=11 // pred_region
          %s172 = ssub.s32 256, 256
          %173 = vsyncadd [#allocation9], %s172
          %s174 = sshll.u32 [#allocation8], 4
          %s175 = int_to_ptr.vmem [resolvable:$true] %s174
          %180 = dma.hbm_to_vmem [thread:$0]  %s3, 256, %s175, [#allocation9], 128, 128, 8
        $region20: #{tpu_custom_call.1} parent=11 // pred_fallthru
          _
      $region12: #{tpu_custom_call.1} parent=5 // pred_fallthru
        _
      %p181 = scmp.lt.s32.totalorder %s20, 2
      // Predicated region
      $region21: #{tpu_custom_call.1} parent=5 // pred_check
        %p182 = pneg %p181
      $region22: #{tpu_custom_call.1} parent=5 // pred_check_branch
        %184 = sbr.rel (%p182) target = $region24
      $region23: #{tpu_custom_call.1} parent=5 // pred_region
        // Predicated region
        $region25: #{tpu_custom_call.1} parent=23 // pred_check
          %p185 = pneg %p40
        $region26: #{tpu_custom_call.1} parent=23 // pred_check_branch
          %187 = sbr.rel (%p185) target = $region28
        $region27: #{tpu_custom_call.1} parent=23 // pred_region
          %s188 = sand.u32 %s30, 1
          %s189 = scalar_lea.sflag [#allocation3], %s188
          %s190 = sand.u32 %s30, 1
          %s191 = smul.addr %s190, 8
          %s192 = scalar_lea.vmem [#allocation2], %s191
          %s194 = ssub.s32 128, 128
          %195 = vsyncadd %s189, %s194
          %s196 = smul.addr %s20, 128
          %s197 = scalar_lea.hbm %s0, %s196
          %s199 = sshll.u32 %s192, 4
          %s200 = int_to_ptr.vmem [resolvable:$true] %s199
          %202 = dma.hbm_to_vmem [thread:$0]  %s197, 128, %s200, %s189
        $region28: #{tpu_custom_call.1} parent=23 // pred_fallthru
          _
        // Predicated region
        $region29: #{tpu_custom_call.1} parent=23 // pred_check
          %p203 = pneg %p66
        $region30: #{tpu_custom_call.1} parent=23 // pred_check_branch
          %205 = sbr.rel (%p203) target = $region32
        $region31: #{tpu_custom_call.1} parent=23 // pred_region
          %s206 = sand.u32 %s20, 1
          %s207 = scalar_lea.sflag [#allocation6], %s206
          %s208 = sand.u32 %s56, 1
          %s209 = smul.addr %s208, 8
          %s210 = scalar_lea.vmem [#allocation5], %s209
          %s212 = ssub.s32 128, 128
          %213 = vsyncadd %s207, %s212
          %s214 = smul.addr %s20, 128
          %s215 = scalar_lea.hbm %s1, %s214
          %s217 = sshll.u32 %s210, 4
          %s218 = int_to_ptr.vmem [resolvable:$true] %s217
          %220 = dma.hbm_to_vmem [thread:$0]  %s215, 128, %s218, %s207
        $region32: #{tpu_custom_call.1} parent=23 // pred_fallthru
          _
      $region24: #{tpu_custom_call.1} parent=5 // pred_fallthru
        _
      %p221 = scmp.le.s32.totalorder 1, %s20
      %p222 = scmp.lt.s32.totalorder %s20, 3
      %p223 = pnand %p221, %p222
      %p224 = pneg %p223
      // Predicated region
      $region33: #{tpu_custom_call.1} parent=5 // pred_check
        _
      $region34: #{tpu_custom_call.1} parent=5 // pred_check_branch
        %226 = sbr.rel (%p223) target = $region36
      $region35: #{tpu_custom_call.1} parent=5 // pred_region
        %s227 = ssub.s32 %s20, 1
        %s228 = sand.u32 %s33, 1
        %s229 = scalar_lea.sflag [#allocation3], %s228
        %s230 = sand.u32 %s33, 1
        %s231 = smul.addr %s230, 8
        %s232 = scalar_lea.vmem [#allocation2], %s231
        // Predicated region
        $region37: #{tpu_custom_call.1} parent=35 // pred_check
          %p233 = pneg %p46
        $region38: #{tpu_custom_call.1} parent=35 // pred_check_branch
          %235 = sbr.rel (%p233) target = $region40
        $region39: #{tpu_custom_call.1} parent=35 // pred_region
          %236 = dma.done %s229, 128
        $region40: #{tpu_custom_call.1} parent=35 // pred_fallthru
          _
        %s237 = sand.u32 %s25, 1
        %s238 = scalar_lea.sflag [#allocation6], %s237
        %s239 = sand.u32 %s59, 1
        %s240 = smul.addr %s239, 8
        %s241 = scalar_lea.vmem [#allocation5], %s240
        // Predicated region
        $region41: #{tpu_custom_call.1} parent=35 // pred_check
          %p242 = pneg %p72
        $region42: #{tpu_custom_call.1} parent=35 // pred_check_branch
          %244 = sbr.rel (%p242) target = $region44
        $region43: #{tpu_custom_call.1} parent=35 // pred_region
          %245 = dma.done %s238, 128
        $region44: #{tpu_custom_call.1} parent=35 // pred_fallthru
          _
        // Predicated region
        $region45: #{tpu_custom_call.1} parent=35 // pred_check
          %p246 = pneg %p93
        $region46: #{tpu_custom_call.1} parent=35 // pred_check_branch
          %248 = sbr.rel (%p246) target = $region48
        $region47: #{tpu_custom_call.1} parent=35 // pred_region
          %249 = dma.done [#allocation6], 2048
        $region48: #{tpu_custom_call.1} parent=35 // pred_fallthru
          _
        // Predicated region
        $region49: #{tpu_custom_call.1} parent=35 // pred_check
          %p250 = pneg %p114
        $region50: #{tpu_custom_call.1} parent=35 // pred_check_branch
          %252 = sbr.rel (%p250) target = $region52
        $region51: #{tpu_custom_call.1} parent=35 // pred_region
          %253 = dma.done [#allocation9], 256
        $region52: #{tpu_custom_call.1} parent=35 // pred_fallthru
          _
        %s254 = sand.u32 %s33, 1
        %s255 = scalar_lea.sflag [#allocation3], %s254
        %s256 = sand.u32 %s33, 1
        %s257 = smul.addr %s256, 8
        %s258 = scalar_lea.vmem [#allocation2], %s257
        %p259 = pneg %p46
        %p260 = pneg %p43
        %s261 = sand.u32 %s25, 1
        %s262 = scalar_lea.sflag [#allocation6], %s261
        %s263 = sand.u32 %s59, 1
        %s264 = smul.addr %s263, 8
        %s265 = scalar_lea.vmem [#allocation5], %s264
        %p266 = pneg %p72
        %p267 = pneg %p69
        %p268 = pneg %p93
        %p269 = pneg %p90
        %p270 = pneg %p114
        %p271 = pneg %p111
        %p272 = pneg %p140
        %p273 = pneg %p137
        %s274 = sand.u32 %s127, 1
        %s275 = scalar_lea.sflag [#allocation4], %s274
        %s276 = sand.u32 %s127, 1
        %s277 = smul.addr %s276, 8
        %s278 = scalar_lea.vmem [#allocation10], %s277
        %v279 = vld [vmem:[%s232] sm:$0xff]
        %v280 = vld [vmem:[%s241] sm:$0xff]
        %v281 = vadd.f32 %v279, %v280
        %v282 = vld [vmem:[#allocation7] sm:$0xff]
        %v283 = vld [vmem:[#allocation7 + $0x8] sm:$0xff]
        %v284 = vld [vmem:[#allocation7 + $0x10] sm:$0xff]
        %v285 = vld [vmem:[#allocation7 + $0x18] sm:$0xff]
        %v286 = vld [vmem:[#allocation7 + $0x20] sm:$0xff]
        %v287 = vld [vmem:[#allocation7 + $0x28] sm:$0xff]
        %v288 = vld [vmem:[#allocation7 + $0x30] sm:$0xff]
        %v289 = vld [vmem:[#allocation7 + $0x38] sm:$0xff]
        %v290 = vld [vmem:[#allocation7 + $0x40] sm:$0xff]
        %v291 = vld [vmem:[#allocation7 + $0x48] sm:$0xff]
        %v292 = vld [vmem:[#allocation7 + $0x50] sm:$0xff]
        %v293 = vld [vmem:[#allocation7 + $0x58] sm:$0xff]
        %v294 = vld [vmem:[#allocation7 + $0x60] sm:$0xff]
        %v295 = vld [vmem:[#allocation7 + $0x68] sm:$0xff]
        %v296 = vld [vmem:[#allocation7 + $0x70] sm:$0xff]
        %v297 = vld [vmem:[#allocation7 + $0x78] sm:$0xff]
        %v298 = vld [vmem:[#allocation8] sm:$0x1]
        %v299 = vld [vmem:[#allocation8 + $0x1] sm:$0x1]
        %v300 = vld [vmem:[#allocation8 + $0x2] sm:$0x1]
        %v301 = vld [vmem:[#allocation8 + $0x3] sm:$0x1]
        %v302 = vld [vmem:[#allocation8 + $0x4] sm:$0x1]
        %v303 = vld [vmem:[#allocation8 + $0x5] sm:$0x1]
        %v304 = vld [vmem:[#allocation8 + $0x6] sm:$0x1]
        %v305 = vld [vmem:[#allocation8 + $0x7] sm:$0x1]
        %v306 = vld [vmem:[#allocation8 + $0x8] sm:$0x1]
        %v307 = vld [vmem:[#allocation8 + $0x9] sm:$0x1]
        %vm308 = vcmask 261120
        %v310 = vsel %vm308, %v281, 0
        %v313 = vsel %vm308, %v279, 0
        %315 = vmatprep.subr.mxu0 0.0
        %316 = vmatpush1.msra.mxu0 0.0
        %317 = vmatprep.subr.mxu0 0.0
        %318 = vmatpush1.msra.mxu0 0.0
        %319 = vmatprep.subr.mxu0 0.0
        %320 = vmatpush1.msra.mxu0 0.0
        %321 = vmatprep.subr.mxu0 0.0
        %322 = vmatpush1.msra.mxu0 0.0
        %323 = vmatprep.subr.mxu0 0.0
        %324 = vmatpush1.msra.mxu0 0.0
        %325 = vmatprep.subr.mxu0 0.0
        %326 = vmatpush1.msra.mxu0 0.0
        %327 = vmatprep.subr.mxu0 0.0
        %328 = vmatpush1.msra.mxu0 0.0
        %329 = vmatprep.subr.mxu0 0.0
        %330 = vmatpush1.msra.mxu0 0.0
        %331 = vmatprep.subr.mxu0 0.0
        %332 = vmatpush1.msra.mxu0 0.0
        %333 = vmatprep.subr.mxu0 0.0
        %334 = vmatpush1.msra.mxu0 0.0
        %335 = vmatprep.subr.mxu0 0.0
        %336 = vmatpush1.msra.mxu0 0.0
        %337 = vmatprep.subr.mxu0 0.0
        %338 = vmatpush1.msra.mxu0 0.0
        %339 = vmatprep.subr.mxu0 0.0
        %340 = vmatpush1.msra.mxu0 %v285
        %341 = vmatprep.subr.mxu0 0.0
        %342 = vmatpush1.msra.mxu0 %v284
        %343 = vmatprep.subr.mxu0 0.0
        %344 = vmatpush1.msra.mxu0 %v283
        %345 = vmatprep.subr.mxu0 0.0
        %346 = vmatpush1.msra.mxu0 %v282
        %347 = vmatprep.subr.mxu0 0.0
        %348 = vmatpush2.msra.mxu0 0.0
        %349 = vmatprep.subr.mxu0 0.0
        %350 = vmatpush2.msra.mxu0 0.0
        %351 = vmatprep.subr.mxu0 0.0
        %352 = vmatpush2.msra.mxu0 0.0
        %353 = vmatprep.subr.mxu0 0.0
        %354 = vmatpush2.msra.mxu0 0.0
        %355 = vmatprep.subr.mxu0 0.0
        %356 = vmatpush2.msra.mxu0 0.0
        %357 = vmatprep.subr.mxu0 0.0
        %358 = vmatpush2.msra.mxu0 0.0
        %359 = vmatprep.subr.mxu0 0.0
        %360 = vmatpush2.msra.mxu0 0.0
        %361 = vmatprep.subr.mxu0 0.0
        %362 = vmatpush2.msra.mxu0 0.0
        %363 = vmatprep.subr.mxu0 0.0
        %364 = vmatpush2.msra.mxu0 0.0
        %365 = vmatprep.subr.mxu0 0.0
        %366 = vmatpush2.msra.mxu0 0.0
        %367 = vmatprep.subr.mxu0 0.0
        %368 = vmatpush2.msra.mxu0 0.0
        %369 = vmatprep.subr.mxu0 0.0
        %370 = vmatpush2.msra.mxu0 0.0
        %371 = vmatprep.subr.mxu0 0.0
        %372 = vmatpush2.msra.mxu0 0.0
        %373 = vmatprep.subr.mxu0 0.0
        %374 = vmatpush2.msra.mxu0 0.0
        %375 = vmatprep.subr.mxu0 0.0
        %376 = vmatpush2.msra.mxu0 0.0
        %377 = vmatprep.subr.mxu0 0.0
        %378 = vmatpush2.msra.mxu0 0.0
        %379 = vmatprep.mubr.f32.mxu0 0.0
        %380 = vmatmul.mubr.f32.gmra.mxu0 %v310
        %v381 = vpop.f32.mrf.mxu0
        %v382 = vadd.f32 0.0, %v381
        %v383 = vpop.f32.mrf.mxu0
        %384 = vmatprep.mubr.f32.mxu0 0.0
        %385 = vmatmul.mubr.f32.gmra.mxu0 %v313
        %v386 = vpop.f32.mrf.mxu0
        %v387 = vadd.f32 0.0, %v386
        %v388 = vpop.f32.mrf.mxu0
        %389 = vdwg.mxu0
        %v390 = vlaneseq
        %v391 = vshrl.u32 %v390, 7
        %v392 = vsub.s32 0, %v391
        %v393 = vrot.slane %v298, %v392
        %v394 = vadd.f32 %v382, %v393
        %v395 = vmul.f32 %v394, 0.35355338
        %v396 = vlaneseq
        %v397 = vshrl.u32 %v396, 7
        %v398 = vsub.s32 0, %v397
        %v399 = vrot.slane %v299, %v398
        %401 = vrot.lane.b32.xlu0 %v399, 32
        %v402 = vpop.permute.xlu0 %401
        %v404 = vadd.f32 %v382, %v402
        %v405 = vlaneseq
        %v406 = vshrl.u32 %v405, 7
        %v407 = vsub.s32 0, %v406
        %v408 = vrot.slane %v300, %v407
        %410 = vrot.lane.b32.xlu0 %v408, 64
        %v411 = vpop.permute.xlu0 %410
        %v413 = vadd.f32 %v387, %v411
        %415 = vrot.lane.b32.xlu0 %v395, 120
        %v416 = vpop.permute.xlu0 %415
        %417 = vrot.lane.b32.xlu0 %v395, 112
        %v418 = vpop.permute.xlu0 %417
        %419 = vrot.lane.b32.xlu0 %v395, 104
        %v420 = vpop.permute.xlu0 %419
        %422 = vrot.lane.b32.xlu0 %v404, 120
        %v423 = vpop.permute.xlu0 %422
        %424 = vrot.lane.b32.xlu0 %v404, 112
        %v425 = vpop.permute.xlu0 %424
        %426 = vrot.lane.b32.xlu0 %v404, 104
        %v427 = vpop.permute.xlu0 %426
        %429 = vrot.lane.b32.xlu0 %v413, 120
        %v430 = vpop.permute.xlu0 %429
        %431 = vrot.lane.b32.xlu0 %v413, 112
        %v432 = vpop.permute.xlu0 %431
        %433 = vrot.lane.b32.xlu0 %v413, 104
        %v434 = vpop.permute.xlu0 %433
        %435 = vrot.lane.b32.xlu0 %v404, 96
        %v436 = vpop.permute.xlu0 %435
        %vm437 = vcmask 64512
        %v438 = vsel %vm437, %v395, 0
        %v440 = vsel %vm437, %v436, 0
        %442 = vmatprep.subr.mxu0 0.0
        %443 = vmatpush1.xpose.msra.mxu0 0.0
        %444 = vmatprep.subr.mxu0 0.0
        %445 = vmatpush1.xpose.msra.mxu0 0.0
        %446 = vmatprep.subr.mxu0 0.0
        %447 = vmatpush1.xpose.msra.mxu0 0.0
        %448 = vmatprep.subr.mxu0 0.0
        %449 = vmatpush1.xpose.msra.mxu0 0.0
        %450 = vmatprep.subr.mxu0 0.0
        %451 = vmatpush1.xpose.msra.mxu0 0.0
        %452 = vmatprep.subr.mxu0 0.0
        %453 = vmatpush1.xpose.msra.mxu0 0.0
        %454 = vmatprep.subr.mxu0 0.0
        %455 = vmatpush1.xpose.msra.mxu0 0.0
        %456 = vmatprep.subr.mxu0 0.0
        %457 = vmatpush1.xpose.msra.mxu0 0.0
        %458 = vmatprep.subr.mxu0 0.0
        %459 = vmatpush1.xpose.msra.mxu0 0.0
        %460 = vmatprep.subr.mxu0 0.0
        %461 = vmatpush1.xpose.msra.mxu0 0.0
        %462 = vmatprep.subr.mxu0 0.0
        %463 = vmatpush1.xpose.msra.mxu0 0.0
        %464 = vmatprep.subr.mxu0 0.0
        %465 = vmatpush1.xpose.msra.mxu0 0.0
        %466 = vmatprep.subr.mxu0 0.0
        %467 = vmatpush1.xpose.msra.mxu0 0.0
        %468 = vmatprep.subr.mxu0 0.0
        %469 = vmatpush1.xpose.msra.mxu0 0.0
        %470 = vmatprep.subr.mxu0 0.0
        %471 = vmatpush1.xpose.msra.mxu0 0.0
        %472 = vmatprep.subr.mxu0 0.0
        %473 = vmatpush1.xpose.msra.mxu0 %v440
        %474 = vmatprep.subr.mxu0 0.0
        %475 = vmatpush2.xpose.msra.mxu0 0.0
        %476 = vmatprep.subr.mxu0 0.0
        %477 = vmatpush2.xpose.msra.mxu0 0.0
        %478 = vmatprep.subr.mxu0 0.0
        %479 = vmatpush2.xpose.msra.mxu0 0.0
        %480 = vmatprep.subr.mxu0 0.0
        %481 = vmatpush2.xpose.msra.mxu0 0.0
        %482 = vmatprep.subr.mxu0 0.0
        %483 = vmatpush2.xpose.msra.mxu0 0.0
        %484 = vmatprep.subr.mxu0 0.0
        %485 = vmatpush2.xpose.msra.mxu0 0.0
        %486 = vmatprep.subr.mxu0 0.0
        %487 = vmatpush2.xpose.msra.mxu0 0.0
        %488 = vmatprep.subr.mxu0 0.0
        %489 = vmatpush2.xpose.msra.mxu0 0.0
        %490 = vmatprep.subr.mxu0 0.0
        %491 = vmatpush2.xpose.msra.mxu0 0.0
        %492 = vmatprep.subr.mxu0 0.0
        %493 = vmatpush2.xpose.msra.mxu0 0.0
        %494 = vmatprep.subr.mxu0 0.0
        %495 = vmatpush2.xpose.msra.mxu0 0.0
        %496 = vmatprep.subr.mxu0 0.0
        %497 = vmatpush2.xpose.msra.mxu0 0.0
        %498 = vmatprep.subr.mxu0 0.0
        %499 = vmatpush2.xpose.msra.mxu0 0.0
        %500 = vmatprep.subr.mxu0 0.0
        %501 = vmatpush2.xpose.msra.mxu0 0.0
        %502 = vmatprep.subr.mxu0 0.0
        %503 = vmatpush2.xpose.msra.mxu0 0.0
        %504 = vmatprep.subr.mxu0 0.0
        %505 = vmatpush2.xpose.msra.mxu0 0.0
        %506 = vmatprep.mubr.f32.mxu0 0.0
        %507 = vmatmul.mubr.f32.gmra.mxu0 %v438
        %v508 = vpop.f32.mrf.mxu0
        %v509 = vadd.f32 0.0, %v508
        %v510 = vpop.f32.mrf.mxu0
        %511 = vdwg.mxu0
        %512 = vrot.lane.b32.xlu0 %v423, 96
        %v513 = vpop.permute.xlu0 %512
        %v514 = vsel %vm437, %v416, 0
        %v516 = vsel %vm437, %v513, 0
        %518 = vmatprep.subr.mxu0 0.0
        %519 = vmatpush1.xpose.msra.mxu0 0.0
        %520 = vmatprep.subr.mxu0 0.0
        %521 = vmatpush1.xpose.msra.mxu0 0.0
        %522 = vmatprep.subr.mxu0 0.0
        %523 = vmatpush1.xpose.msra.mxu0 0.0
        %524 = vmatprep.subr.mxu0 0.0
        %525 = vmatpush1.xpose.msra.mxu0 0.0
        %526 = vmatprep.subr.mxu0 0.0
        %527 = vmatpush1.xpose.msra.mxu0 0.0
        %528 = vmatprep.subr.mxu0 0.0
        %529 = vmatpush1.xpose.msra.mxu0 0.0
        %530 = vmatprep.subr.mxu0 0.0
        %531 = vmatpush1.xpose.msra.mxu0 0.0
        %532 = vmatprep.subr.mxu0 0.0
        %533 = vmatpush1.xpose.msra.mxu0 0.0
        %534 = vmatprep.subr.mxu0 0.0
        %535 = vmatpush1.xpose.msra.mxu0 0.0
        %536 = vmatprep.subr.mxu0 0.0
        %537 = vmatpush1.xpose.msra.mxu0 0.0
        %538 = vmatprep.subr.mxu0 0.0
        %539 = vmatpush1.xpose.msra.mxu0 0.0
        %540 = vmatprep.subr.mxu0 0.0
        %541 = vmatpush1.xpose.msra.mxu0 0.0
        %542 = vmatprep.subr.mxu0 0.0
        %543 = vmatpush1.xpose.msra.mxu0 0.0
        %544 = vmatprep.subr.mxu0 0.0
        %545 = vmatpush1.xpose.msra.mxu0 0.0
        %546 = vmatprep.subr.mxu0 0.0
        %547 = vmatpush1.xpose.msra.mxu0 0.0
        %548 = vmatprep.subr.mxu0 0.0
        %549 = vmatpush1.xpose.msra.mxu0 %v516
        %550 = vmatprep.subr.mxu0 0.0
        %551 = vmatpush2.xpose.msra.mxu0 0.0
        %552 = vmatprep.subr.mxu0 0.0
        %553 = vmatpush2.xpose.msra.mxu0 0.0
        %554 = vmatprep.subr.mxu0 0.0
        %555 = vmatpush2.xpose.msra.mxu0 0.0
        %556 = vmatprep.subr.mxu0 0.0
        %557 = vmatpush2.xpose.msra.mxu0 0.0
        %558 = vmatprep.subr.mxu0 0.0
        %559 = vmatpush2.xpose.msra.mxu0 0.0
        %560 = vmatprep.subr.mxu0 0.0
        %561 = vmatpush2.xpose.msra.mxu0 0.0
        %562 = vmatprep.subr.mxu0 0.0
        %563 = vmatpush2.xpose.msra.mxu0 0.0
        %564 = vmatprep.subr.mxu0 0.0
        %565 = vmatpush2.xpose.msra.mxu0 0.0
        %566 = vmatprep.subr.mxu0 0.0
        %567 = vmatpush2.xpose.msra.mxu0 0.0
        %568 = vmatprep.subr.mxu0 0.0
        %569 = vmatpush2.xpose.msra.mxu0 0.0
        %570 = vmatprep.subr.mxu0 0.0
        %571 = vmatpush2.xpose.msra.mxu0 0.0
        %572 = vmatprep.subr.mxu0 0.0
        %573 = vmatpush2.xpose.msra.mxu0 0.0
        %574 = vmatprep.subr.mxu0 0.0
        %575 = vmatpush2.xpose.msra.mxu0 0.0
        %576 = vmatprep.subr.mxu0 0.0
        %577 = vmatpush2.xpose.msra.mxu0 0.0
        %578 = vmatprep.subr.mxu0 0.0
        %579 = vmatpush2.xpose.msra.mxu0 0.0
        %580 = vmatprep.subr.mxu0 0.0
        %581 = vmatpush2.xpose.msra.mxu0 0.0
        %582 = vmatprep.mubr.f32.mxu0 0.0
        %583 = vmatmul.mubr.f32.gmra.mxu0 %v514
        %v584 = vpop.f32.mrf.mxu0
        %v585 = vadd.f32 0.0, %v584
        %v586 = vpop.f32.mrf.mxu0
        %587 = vdwg.mxu0
        %588 = vrot.lane.b32.xlu0 %v425, 96
        %v589 = vpop.permute.xlu0 %588
        %v590 = vsel %vm437, %v418, 0
        %v592 = vsel %vm437, %v589, 0
        %594 = vmatprep.subr.mxu0 0.0
        %595 = vmatpush1.xpose.msra.mxu0 0.0
        %596 = vmatprep.subr.mxu0 0.0
        %597 = vmatpush1.xpose.msra.mxu0 0.0
        %598 = vmatprep.subr.mxu0 0.0
        %599 = vmatpush1.xpose.msra.mxu0 0.0
        %600 = vmatprep.subr.mxu0 0.0
        %601 = vmatpush1.xpose.msra.mxu0 0.0
        %602 = vmatprep.subr.mxu0 0.0
        %603 = vmatpush1.xpose.msra.mxu0 0.0
        %604 = vmatprep.subr.mxu0 0.0
        %605 = vmatpush1.xpose.msra.mxu0 0.0
        %606 = vmatprep.subr.mxu0 0.0
        %607 = vmatpush1.xpose.msra.mxu0 0.0
        %608 = vmatprep.subr.mxu0 0.0
        %609 = vmatpush1.xpose.msra.mxu0 0.0
        %610 = vmatprep.subr.mxu0 0.0
        %611 = vmatpush1.xpose.msra.mxu0 0.0
        %612 = vmatprep.subr.mxu0 0.0
        %613 = vmatpush1.xpose.msra.mxu0 0.0
        %614 = vmatprep.subr.mxu0 0.0
        %615 = vmatpush1.xpose.msra.mxu0 0.0
        %616 = vmatprep.subr.mxu0 0.0
        %617 = vmatpush1.xpose.msra.mxu0 0.0
        %618 = vmatprep.subr.mxu0 0.0
        %619 = vmatpush1.xpose.msra.mxu0 0.0
        %620 = vmatprep.subr.mxu0 0.0
        %621 = vmatpush1.xpose.msra.mxu0 0.0
        %622 = vmatprep.subr.mxu0 0.0
        %623 = vmatpush1.xpose.msra.mxu0 0.0
        %624 = vmatprep.subr.mxu0 0.0
        %625 = vmatpush1.xpose.msra.mxu0 %v592
        %626 = vmatprep.subr.mxu0 0.0
        %627 = vmatpush2.xpose.msra.mxu0 0.0
        %628 = vmatprep.subr.mxu0 0.0
        %629 = vmatpush2.xpose.msra.mxu0 0.0
        %630 = vmatprep.subr.mxu0 0.0
        %631 = vmatpush2.xpose.msra.mxu0 0.0
        %632 = vmatprep.subr.mxu0 0.0
        %633 = vmatpush2.xpose.msra.mxu0 0.0
        %634 = vmatprep.subr.mxu0 0.0
        %635 = vmatpush2.xpose.msra.mxu0 0.0
        %636 = vmatprep.subr.mxu0 0.0
        %637 = vmatpush2.xpose.msra.mxu0 0.0
        %638 = vmatprep.subr.mxu0 0.0
        %639 = vmatpush2.xpose.msra.mxu0 0.0
        %640 = vmatprep.subr.mxu0 0.0
        %641 = vmatpush2.xpose.msra.mxu0 0.0
        %642 = vmatprep.subr.mxu0 0.0
        %643 = vmatpush2.xpose.msra.mxu0 0.0
        %644 = vmatprep.subr.mxu0 0.0
        %645 = vmatpush2.xpose.msra.mxu0 0.0
        %646 = vmatprep.subr.mxu0 0.0
        %647 = vmatpush2.xpose.msra.mxu0 0.0
        %648 = vmatprep.subr.mxu0 0.0
        %649 = vmatpush2.xpose.msra.mxu0 0.0
        %650 = vmatprep.subr.mxu0 0.0
        %651 = vmatpush2.xpose.msra.mxu0 0.0
        %652 = vmatprep.subr.mxu0 0.0
        %653 = vmatpush2.xpose.msra.mxu0 0.0
        %654 = vmatprep.subr.mxu0 0.0
        %655 = vmatpush2.xpose.msra.mxu0 0.0
        %656 = vmatprep.subr.mxu0 0.0
        %657 = vmatpush2.xpose.msra.mxu0 0.0
        %658 = vmatprep.mubr.f32.mxu0 0.0
        %659 = vmatmul.mubr.f32.gmra.mxu0 %v590
        %v660 = vpop.f32.mrf.mxu0
        %v661 = vadd.f32 0.0, %v660
        %v662 = vpop.f32.mrf.mxu0
        %663 = vdwg.mxu0
        %664 = vrot.lane.b32.xlu0 %v427, 96
        %v665 = vpop.permute.xlu0 %664
        %v666 = vsel %vm437, %v420, 0
        %v668 = vsel %vm437, %v665, 0
        %670 = vmatprep.subr.mxu0 0.0
        %671 = vmatpush1.xpose.msra.mxu0 0.0
        %672 = vmatprep.subr.mxu0 0.0
        %673 = vmatpush1.xpose.msra.mxu0 0.0
        %674 = vmatprep.subr.mxu0 0.0
        %675 = vmatpush1.xpose.msra.mxu0 0.0
        %676 = vmatprep.subr.mxu0 0.0
        %677 = vmatpush1.xpose.msra.mxu0 0.0
        %678 = vmatprep.subr.mxu0 0.0
        %679 = vmatpush1.xpose.msra.mxu0 0.0
        %680 = vmatprep.subr.mxu0 0.0
        %681 = vmatpush1.xpose.msra.mxu0 0.0
        %682 = vmatprep.subr.mxu0 0.0
        %683 = vmatpush1.xpose.msra.mxu0 0.0
        %684 = vmatprep.subr.mxu0 0.0
        %685 = vmatpush1.xpose.msra.mxu0 0.0
        %686 = vmatprep.subr.mxu0 0.0
        %687 = vmatpush1.xpose.msra.mxu0 0.0
        %688 = vmatprep.subr.mxu0 0.0
        %689 = vmatpush1.xpose.msra.mxu0 0.0
        %690 = vmatprep.subr.mxu0 0.0
        %691 = vmatpush1.xpose.msra.mxu0 0.0
        %692 = vmatprep.subr.mxu0 0.0
        %693 = vmatpush1.xpose.msra.mxu0 0.0
        %694 = vmatprep.subr.mxu0 0.0
        %695 = vmatpush1.xpose.msra.mxu0 0.0
        %696 = vmatprep.subr.mxu0 0.0
        %697 = vmatpush1.xpose.msra.mxu0 0.0
        %698 = vmatprep.subr.mxu0 0.0
        %699 = vmatpush1.xpose.msra.mxu0 0.0
        %700 = vmatprep.subr.mxu0 0.0
        %701 = vmatpush1.xpose.msra.mxu0 %v668
        %702 = vmatprep.subr.mxu0 0.0
        %703 = vmatpush2.xpose.msra.mxu0 0.0
        %704 = vmatprep.subr.mxu0 0.0
        %705 = vmatpush2.xpose.msra.mxu0 0.0
        %706 = vmatprep.subr.mxu0 0.0
        %707 = vmatpush2.xpose.msra.mxu0 0.0
        %708 = vmatprep.subr.mxu0 0.0
        %709 = vmatpush2.xpose.msra.mxu0 0.0
        %710 = vmatprep.subr.mxu0 0.0
        %711 = vmatpush2.xpose.msra.mxu0 0.0
        %712 = vmatprep.subr.mxu0 0.0
        %713 = vmatpush2.xpose.msra.mxu0 0.0
        %714 = vmatprep.subr.mxu0 0.0
        %715 = vmatpush2.xpose.msra.mxu0 0.0
        %716 = vmatprep.subr.mxu0 0.0
        %717 = vmatpush2.xpose.msra.mxu0 0.0
        %718 = vmatprep.subr.mxu0 0.0
        %719 = vmatpush2.xpose.msra.mxu0 0.0
        %720 = vmatprep.subr.mxu0 0.0
        %721 = vmatpush2.xpose.msra.mxu0 0.0
        %722 = vmatprep.subr.mxu0 0.0
        %723 = vmatpush2.xpose.msra.mxu0 0.0
        %724 = vmatprep.subr.mxu0 0.0
        %725 = vmatpush2.xpose.msra.mxu0 0.0
        %726 = vmatprep.subr.mxu0 0.0
        %727 = vmatpush2.xpose.msra.mxu0 0.0
        %728 = vmatprep.subr.mxu0 0.0
        %729 = vmatpush2.xpose.msra.mxu0 0.0
        %730 = vmatprep.subr.mxu0 0.0
        %731 = vmatpush2.xpose.msra.mxu0 0.0
        %732 = vmatprep.subr.mxu0 0.0
        %733 = vmatpush2.xpose.msra.mxu0 0.0
        %734 = vmatprep.mubr.f32.mxu0 0.0
        %735 = vmatmul.mubr.f32.gmra.mxu0 %v666
        %v736 = vpop.f32.mrf.mxu0
        %v737 = vadd.f32 0.0, %v736
        %v738 = vpop.f32.mrf.mxu0
        %739 = vdwg.mxu0
        %v740 = vsel %vm437, %v509, -inf
        %741 = vmax.xlane.f32.xlu0 %v740
        %v742 = vpop.xlane.xlu0 %741
        %v743 = vsel %vm437, %v585, -inf
        %744 = vmax.xlane.f32.xlu0 %v743
        %v745 = vpop.xlane.xlu0 %744
        %v746 = vsel %vm437, %v661, -inf
        %747 = vmax.xlane.f32.xlu0 %v746
        %v748 = vpop.xlane.xlu0 %747
        %v749 = vsel %vm437, %v737, -inf
        %750 = vmax.xlane.f32.xlu0 %v749
        %v751 = vpop.xlane.xlu0 %750
        %v752 = vsub.f32 %v509, %v742
        %v753 = vsub.f32 %v585, %v745
        %v754 = vsub.f32 %v661, %v748
        %v755 = vsub.f32 %v737, %v751
        %v756 = vmul.f32 %v752, 1.442695
        %v757 = vpow.pop %v756
        %v758 = vmul.f32 %v753, 1.442695
        %v759 = vpow.pop %v758
        %v760 = vmul.f32 %v754, 1.442695
        %v761 = vpow.pop %v760
        %v762 = vmul.f32 %v755, 1.442695
        %v763 = vpow.pop %v762
        %v764 = vsel %vm437, %v757, 0.0
        %765 = vadd.xlane.f32.xlu0 %v764
        %v766 = vpop.xlane.xlu0 %765
        %v767 = vsel %vm437, %v759, 0.0
        %768 = vadd.xlane.f32.xlu0 %v767
        %v769 = vpop.xlane.xlu0 %768
        %v770 = vsel %vm437, %v761, 0.0
        %771 = vadd.xlane.f32.xlu0 %v770
        %v772 = vpop.xlane.xlu0 %771
        %v773 = vsel %vm437, %v763, 0.0
        %774 = vadd.xlane.f32.xlu0 %v773
        %v775 = vpop.xlane.xlu0 %774
        %v776 = vrcp.pop %v766
        %v777 = vmul.f32 %v757, %v776
        %v778 = vrcp.pop %v769
        %v779 = vmul.f32 %v759, %v778
        %v780 = vrcp.pop %v772
        %v781 = vmul.f32 %v761, %v780
        %v782 = vrcp.pop %v775
        %v783 = vmul.f32 %v763, %v782
        %784 = vrot.lane.b32.xlu0 %v413, 64
        %v785 = vpop.permute.xlu0 %784
        %v788 = vsel %vm437, %v777, 0
        %790 = vmatprep.subr.mxu0 0.0
        %791 = vmatpush1.msra.mxu0 0.0
        %792 = vmatprep.subr.mxu0 0.0
        %793 = vmatpush1.msra.mxu0 0.0
        %794 = vmatprep.subr.mxu0 0.0
        %795 = vmatpush1.msra.mxu0 0.0
        %796 = vmatprep.subr.mxu0 0.0
        %797 = vmatpush1.msra.mxu0 0.0
        %798 = vmatprep.subr.mxu0 0.0
        %799 = vmatpush1.msra.mxu0 0.0
        %800 = vmatprep.subr.mxu0 0.0
        %801 = vmatpush1.msra.mxu0 0.0
        %802 = vmatprep.subr.mxu0 0.0
        %803 = vmatpush1.msra.mxu0 0.0
        %804 = vmatprep.subr.mxu0 0.0
        %805 = vmatpush1.msra.mxu0 0.0
        %806 = vmatprep.subr.mxu0 0.0
        %807 = vmatpush1.msra.mxu0 0.0
        %808 = vmatprep.subr.mxu0 0.0
        %809 = vmatpush1.msra.mxu0 0.0
        %810 = vmatprep.subr.mxu0 0.0
        %811 = vmatpush1.msra.mxu0 0.0
        %812 = vmatprep.subr.mxu0 0.0
        %813 = vmatpush1.msra.mxu0 0.0
        %814 = vmatprep.subr.mxu0 0.0
        %815 = vmatpush1.msra.mxu0 0.0
        %816 = vmatprep.subr.mxu0 0.0
        %817 = vmatpush1.msra.mxu0 0.0
        %818 = vmatprep.subr.mxu0 0.0
        %819 = vmatpush1.msra.mxu0 0.0
        %820 = vmatprep.subr.mxu0 0.0
        %821 = vmatpush1.msra.mxu0 %v785
        %822 = vmatprep.subr.mxu0 0.0
        %823 = vmatpush2.msra.mxu0 0.0
        %824 = vmatprep.subr.mxu0 0.0
        %825 = vmatpush2.msra.mxu0 0.0
        %826 = vmatprep.subr.mxu0 0.0
        %827 = vmatpush2.msra.mxu0 0.0
        %828 = vmatprep.subr.mxu0 0.0
        %829 = vmatpush2.msra.mxu0 0.0
        %830 = vmatprep.subr.mxu0 0.0
        %831 = vmatpush2.msra.mxu0 0.0
        %832 = vmatprep.subr.mxu0 0.0
        %833 = vmatpush2.msra.mxu0 0.0
        %834 = vmatprep.subr.mxu0 0.0
        %835 = vmatpush2.msra.mxu0 0.0
        %836 = vmatprep.subr.mxu0 0.0
        %837 = vmatpush2.msra.mxu0 0.0
        %838 = vmatprep.subr.mxu0 0.0
        %839 = vmatpush2.msra.mxu0 0.0
        %840 = vmatprep.subr.mxu0 0.0
        %841 = vmatpush2.msra.mxu0 0.0
        %842 = vmatprep.subr.mxu0 0.0
        %843 = vmatpush2.msra.mxu0 0.0
        %844 = vmatprep.subr.mxu0 0.0
        %845 = vmatpush2.msra.mxu0 0.0
        %846 = vmatprep.subr.mxu0 0.0
        %847 = vmatpush2.msra.mxu0 0.0
        %848 = vmatprep.subr.mxu0 0.0
        %849 = vmatpush2.msra.mxu0 0.0
        %850 = vmatprep.subr.mxu0 0.0
        %851 = vmatpush2.msra.mxu0 0.0
        %852 = vmatprep.subr.mxu0 0.0
        %853 = vmatpush2.msra.mxu0 0.0
        %854 = vmatprep.mubr.f32.mxu0 0.0
        %855 = vmatmul.mubr.f32.gmra.mxu0 %v788
        %v856 = vpop.f32.mrf.mxu0
        %v857 = vadd.f32 0.0, %v856
        %v858 = vpop.f32.mrf.mxu0
        %859 = vdwg.mxu0
        %860 = vrot.lane.b32.xlu0 %v430, 64
        %v861 = vpop.permute.xlu0 %860
        %v864 = vsel %vm437, %v779, 0
        %866 = vmatprep.subr.mxu0 0.0
        %867 = vmatpush1.msra.mxu0 0.0
        %868 = vmatprep.subr.mxu0 0.0
        %869 = vmatpush1.msra.mxu0 0.0
        %870 = vmatprep.subr.mxu0 0.0
        %871 = vmatpush1.msra.mxu0 0.0
        %872 = vmatprep.subr.mxu0 0.0
        %873 = vmatpush1.msra.mxu0 0.0
        %874 = vmatprep.subr.mxu0 0.0
        %875 = vmatpush1.msra.mxu0 0.0
        %876 = vmatprep.subr.mxu0 0.0
        %877 = vmatpush1.msra.mxu0 0.0
        %878 = vmatprep.subr.mxu0 0.0
        %879 = vmatpush1.msra.mxu0 0.0
        %880 = vmatprep.subr.mxu0 0.0
        %881 = vmatpush1.msra.mxu0 0.0
        %882 = vmatprep.subr.mxu0 0.0
        %883 = vmatpush1.msra.mxu0 0.0
        %884 = vmatprep.subr.mxu0 0.0
        %885 = vmatpush1.msra.mxu0 0.0
        %886 = vmatprep.subr.mxu0 0.0
        %887 = vmatpush1.msra.mxu0 0.0
        %888 = vmatprep.subr.mxu0 0.0
        %889 = vmatpush1.msra.mxu0 0.0
        %890 = vmatprep.subr.mxu0 0.0
        %891 = vmatpush1.msra.mxu0 0.0
        %892 = vmatprep.subr.mxu0 0.0
        %893 = vmatpush1.msra.mxu0 0.0
        %894 = vmatprep.subr.mxu0 0.0
        %895 = vmatpush1.msra.mxu0 0.0
        %896 = vmatprep.subr.mxu0 0.0
        %897 = vmatpush1.msra.mxu0 %v861
        %898 = vmatprep.subr.mxu0 0.0
        %899 = vmatpush2.msra.mxu0 0.0
        %900 = vmatprep.subr.mxu0 0.0
        %901 = vmatpush2.msra.mxu0 0.0
        %902 = vmatprep.subr.mxu0 0.0
        %903 = vmatpush2.msra.mxu0 0.0
        %904 = vmatprep.subr.mxu0 0.0
        %905 = vmatpush2.msra.mxu0 0.0
        %906 = vmatprep.subr.mxu0 0.0
        %907 = vmatpush2.msra.mxu0 0.0
        %908 = vmatprep.subr.mxu0 0.0
        %909 = vmatpush2.msra.mxu0 0.0
        %910 = vmatprep.subr.mxu0 0.0
        %911 = vmatpush2.msra.mxu0 0.0
        %912 = vmatprep.subr.mxu0 0.0
        %913 = vmatpush2.msra.mxu0 0.0
        %914 = vmatprep.subr.mxu0 0.0
        %915 = vmatpush2.msra.mxu0 0.0
        %916 = vmatprep.subr.mxu0 0.0
        %917 = vmatpush2.msra.mxu0 0.0
        %918 = vmatprep.subr.mxu0 0.0
        %919 = vmatpush2.msra.mxu0 0.0
        %920 = vmatprep.subr.mxu0 0.0
        %921 = vmatpush2.msra.mxu0 0.0
        %922 = vmatprep.subr.mxu0 0.0
        %923 = vmatpush2.msra.mxu0 0.0
        %924 = vmatprep.subr.mxu0 0.0
        %925 = vmatpush2.msra.mxu0 0.0
        %926 = vmatprep.subr.mxu0 0.0
        %927 = vmatpush2.msra.mxu0 0.0
        %928 = vmatprep.subr.mxu0 0.0
        %929 = vmatpush2.msra.mxu0 0.0
        %930 = vmatprep.mubr.f32.mxu0 0.0
        %931 = vmatmul.mubr.f32.gmra.mxu0 %v864
        %v932 = vpop.f32.mrf.mxu0
        %v933 = vadd.f32 0.0, %v932
        %v934 = vpop.f32.mrf.mxu0
        %935 = vdwg.mxu0
        %936 = vrot.lane.b32.xlu0 %v432, 64
        %v937 = vpop.permute.xlu0 %936
        %v940 = vsel %vm437, %v781, 0
        %942 = vmatprep.subr.mxu0 0.0
        %943 = vmatpush1.msra.mxu0 0.0
        %944 = vmatprep.subr.mxu0 0.0
        %945 = vmatpush1.msra.mxu0 0.0
        %946 = vmatprep.subr.mxu0 0.0
        %947 = vmatpush1.msra.mxu0 0.0
        %948 = vmatprep.subr.mxu0 0.0
        %949 = vmatpush1.msra.mxu0 0.0
        %950 = vmatprep.subr.mxu0 0.0
        %951 = vmatpush1.msra.mxu0 0.0
        %952 = vmatprep.subr.mxu0 0.0
        %953 = vmatpush1.msra.mxu0 0.0
        %954 = vmatprep.subr.mxu0 0.0
        %955 = vmatpush1.msra.mxu0 0.0
        %956 = vmatprep.subr.mxu0 0.0
        %957 = vmatpush1.msra.mxu0 0.0
        %958 = vmatprep.subr.mxu0 0.0
        %959 = vmatpush1.msra.mxu0 0.0
        %960 = vmatprep.subr.mxu0 0.0
        %961 = vmatpush1.msra.mxu0 0.0
        %962 = vmatprep.subr.mxu0 0.0
        %963 = vmatpush1.msra.mxu0 0.0
        %964 = vmatprep.subr.mxu0 0.0
        %965 = vmatpush1.msra.mxu0 0.0
        %966 = vmatprep.subr.mxu0 0.0
        %967 = vmatpush1.msra.mxu0 0.0
        %968 = vmatprep.subr.mxu0 0.0
        %969 = vmatpush1.msra.mxu0 0.0
        %970 = vmatprep.subr.mxu0 0.0
        %971 = vmatpush1.msra.mxu0 0.0
        %972 = vmatprep.subr.mxu0 0.0
        %973 = vmatpush1.msra.mxu0 %v937
        %974 = vmatprep.subr.mxu0 0.0
        %975 = vmatpush2.msra.mxu0 0.0
        %976 = vmatprep.subr.mxu0 0.0
        %977 = vmatpush2.msra.mxu0 0.0
        %978 = vmatprep.subr.mxu0 0.0
        %979 = vmatpush2.msra.mxu0 0.0
        %980 = vmatprep.subr.mxu0 0.0
        %981 = vmatpush2.msra.mxu0 0.0
        %982 = vmatprep.subr.mxu0 0.0
        %983 = vmatpush2.msra.mxu0 0.0
        %984 = vmatprep.subr.mxu0 0.0
        %985 = vmatpush2.msra.mxu0 0.0
        %986 = vmatprep.subr.mxu0 0.0
        %987 = vmatpush2.msra.mxu0 0.0
        %988 = vmatprep.subr.mxu0 0.0
        %989 = vmatpush2.msra.mxu0 0.0
        %990 = vmatprep.subr.mxu0 0.0
        %991 = vmatpush2.msra.mxu0 0.0
        %992 = vmatprep.subr.mxu0 0.0
        %993 = vmatpush2.msra.mxu0 0.0
        %994 = vmatprep.subr.mxu0 0.0
        %995 = vmatpush2.msra.mxu0 0.0
        %996 = vmatprep.subr.mxu0 0.0
        %997 = vmatpush2.msra.mxu0 0.0
        %998 = vmatprep.subr.mxu0 0.0
        %999 = vmatpush2.msra.mxu0 0.0
        %1000 = vmatprep.subr.mxu0 0.0
        %1001 = vmatpush2.msra.mxu0 0.0
        %1002 = vmatprep.subr.mxu0 0.0
        %1003 = vmatpush2.msra.mxu0 0.0
        %1004 = vmatprep.subr.mxu0 0.0
        %1005 = vmatpush2.msra.mxu0 0.0
        %1006 = vmatprep.mubr.f32.mxu0 0.0
        %1007 = vmatmul.mubr.f32.gmra.mxu0 %v940
        %v1008 = vpop.f32.mrf.mxu0
        %v1009 = vadd.f32 0.0, %v1008
        %v1010 = vpop.f32.mrf.mxu0
        %1011 = vdwg.mxu0
        %1012 = vrot.lane.b32.xlu0 %v434, 64
        %v1013 = vpop.permute.xlu0 %1012
        %v1016 = vsel %vm437, %v783, 0
        %1018 = vmatprep.subr.mxu0 0.0
        %1019 = vmatpush1.msra.mxu0 0.0
        %1020 = vmatprep.subr.mxu0 0.0
        %1021 = vmatpush1.msra.mxu0 0.0
        %1022 = vmatprep.subr.mxu0 0.0
        %1023 = vmatpush1.msra.mxu0 0.0
        %1024 = vmatprep.subr.mxu0 0.0
        %1025 = vmatpush1.msra.mxu0 0.0
        %1026 = vmatprep.subr.mxu0 0.0
        %1027 = vmatpush1.msra.mxu0 0.0
        %1028 = vmatprep.subr.mxu0 0.0
        %1029 = vmatpush1.msra.mxu0 0.0
        %1030 = vmatprep.subr.mxu0 0.0
        %1031 = vmatpush1.msra.mxu0 0.0
        %1032 = vmatprep.subr.mxu0 0.0
        %1033 = vmatpush1.msra.mxu0 0.0
        %1034 = vmatprep.subr.mxu0 0.0
        %1035 = vmatpush1.msra.mxu0 0.0
        %1036 = vmatprep.subr.mxu0 0.0
        %1037 = vmatpush1.msra.mxu0 0.0
        %1038 = vmatprep.subr.mxu0 0.0
        %1039 = vmatpush1.msra.mxu0 0.0
        %1040 = vmatprep.subr.mxu0 0.0
        %1041 = vmatpush1.msra.mxu0 0.0
        %1042 = vmatprep.subr.mxu0 0.0
        %1043 = vmatpush1.msra.mxu0 0.0
        %1044 = vmatprep.subr.mxu0 0.0
        %1045 = vmatpush1.msra.mxu0 0.0
        %1046 = vmatprep.subr.mxu0 0.0
        %1047 = vmatpush1.msra.mxu0 0.0
        %1048 = vmatprep.subr.mxu0 0.0
        %1049 = vmatpush1.msra.mxu0 %v1013
        %1050 = vmatprep.subr.mxu0 0.0
        %1051 = vmatpush2.msra.mxu0 0.0
        %1052 = vmatprep.subr.mxu0 0.0
        %1053 = vmatpush2.msra.mxu0 0.0
        %1054 = vmatprep.subr.mxu0 0.0
        %1055 = vmatpush2.msra.mxu0 0.0
        %1056 = vmatprep.subr.mxu0 0.0
        %1057 = vmatpush2.msra.mxu0 0.0
        %1058 = vmatprep.subr.mxu0 0.0
        %1059 = vmatpush2.msra.mxu0 0.0
        %1060 = vmatprep.subr.mxu0 0.0
        %1061 = vmatpush2.msra.mxu0 0.0
        %1062 = vmatprep.subr.mxu0 0.0
        %1063 = vmatpush2.msra.mxu0 0.0
        %1064 = vmatprep.subr.mxu0 0.0
        %1065 = vmatpush2.msra.mxu0 0.0
        %1066 = vmatprep.subr.mxu0 0.0
        %1067 = vmatpush2.msra.mxu0 0.0
        %1068 = vmatprep.subr.mxu0 0.0
        %1069 = vmatpush2.msra.mxu0 0.0
        %1070 = vmatprep.subr.mxu0 0.0
        %1071 = vmatpush2.msra.mxu0 0.0
        %1072 = vmatprep.subr.mxu0 0.0
        %1073 = vmatpush2.msra.mxu0 0.0
        %1074 = vmatprep.subr.mxu0 0.0
        %1075 = vmatpush2.msra.mxu0 0.0
        %1076 = vmatprep.subr.mxu0 0.0
        %1077 = vmatpush2.msra.mxu0 0.0
        %1078 = vmatprep.subr.mxu0 0.0
        %1079 = vmatpush2.msra.mxu0 0.0
        %1080 = vmatprep.subr.mxu0 0.0
        %1081 = vmatpush2.msra.mxu0 0.0
        %1082 = vmatprep.mubr.f32.mxu0 0.0
        %1083 = vmatmul.mubr.f32.gmra.mxu0 %v1016
        %v1084 = vpop.f32.mrf.mxu0
        %v1085 = vadd.f32 0.0, %v1084
        %v1086 = vpop.f32.mrf.mxu0
        %1087 = vdwg.mxu0
        %1089 = vrot.lane.b32.xlu0 %v933, 8
        %v1090 = vpop.permute.xlu0 %1089
        %1093 = vrot.lane.b32.xlu0 %v1009, 16
        %v1094 = vpop.permute.xlu0 %1093
        %1097 = vrot.lane.b32.xlu0 %v1085, 24
        %v1098 = vpop.permute.xlu0 %1097
        %v1100 = vsel %vm437, %v857, %v1090
        %vm1101 = vcmask 130048
        %v1102 = vsel %vm1101, %v1100, %v1094
        %vm1103 = vcmask 195584
        %v1104 = vsel %vm1103, %v1102, %v1098
        %v1105 = vlaneseq
        %v1106 = vshrl.u32 %v1105, 7
        %v1107 = vsub.s32 0, %v1106
        %v1108 = vrot.slane %v301, %v1107
        %v1110 = vsel %vm308, %v1104, 0
        %1112 = vmatprep.subr.mxu0 0.0
        %1113 = vmatpush1.msra.mxu0 0.0
        %1114 = vmatprep.subr.mxu0 0.0
        %1115 = vmatpush1.msra.mxu0 0.0
        %1116 = vmatprep.subr.mxu0 0.0
        %1117 = vmatpush1.msra.mxu0 0.0
        %1118 = vmatprep.subr.mxu0 0.0
        %1119 = vmatpush1.msra.mxu0 0.0
        %1120 = vmatprep.subr.mxu0 0.0
        %1121 = vmatpush1.msra.mxu0 0.0
        %1122 = vmatprep.subr.mxu0 0.0
        %1123 = vmatpush1.msra.mxu0 0.0
        %1124 = vmatprep.subr.mxu0 0.0
        %1125 = vmatpush1.msra.mxu0 0.0
        %1126 = vmatprep.subr.mxu0 0.0
        %1127 = vmatpush1.msra.mxu0 0.0
        %1128 = vmatprep.subr.mxu0 0.0
        %1129 = vmatpush1.msra.mxu0 0.0
        %1130 = vmatprep.subr.mxu0 0.0
        %1131 = vmatpush1.msra.mxu0 0.0
        %1132 = vmatprep.subr.mxu0 0.0
        %1133 = vmatpush1.msra.mxu0 0.0
        %1134 = vmatprep.subr.mxu0 0.0
        %1135 = vmatpush1.msra.mxu0 0.0
        %1136 = vmatprep.subr.mxu0 0.0
        %1137 = vmatpush1.msra.mxu0 %v289
        %1138 = vmatprep.subr.mxu0 0.0
        %1139 = vmatpush1.msra.mxu0 %v288
        %1140 = vmatprep.subr.mxu0 0.0
        %1141 = vmatpush1.msra.mxu0 %v287
        %1142 = vmatprep.subr.mxu0 0.0
        %1143 = vmatpush1.msra.mxu0 %v286
        %1144 = vmatprep.subr.mxu0 0.0
        %1145 = vmatpush2.msra.mxu0 0.0
        %1146 = vmatprep.subr.mxu0 0.0
        %1147 = vmatpush2.msra.mxu0 0.0
        %1148 = vmatprep.subr.mxu0 0.0
        %1149 = vmatpush2.msra.mxu0 0.0
        %1150 = vmatprep.subr.mxu0 0.0
        %1151 = vmatpush2.msra.mxu0 0.0
        %1152 = vmatprep.subr.mxu0 0.0
        %1153 = vmatpush2.msra.mxu0 0.0
        %1154 = vmatprep.subr.mxu0 0.0
        %1155 = vmatpush2.msra.mxu0 0.0
        %1156 = vmatprep.subr.mxu0 0.0
        %1157 = vmatpush2.msra.mxu0 0.0
        %1158 = vmatprep.subr.mxu0 0.0
        %1159 = vmatpush2.msra.mxu0 0.0
        %1160 = vmatprep.subr.mxu0 0.0
        %1161 = vmatpush2.msra.mxu0 0.0
        %1162 = vmatprep.subr.mxu0 0.0
        %1163 = vmatpush2.msra.mxu0 0.0
        %1164 = vmatprep.subr.mxu0 0.0
        %1165 = vmatpush2.msra.mxu0 0.0
        %1166 = vmatprep.subr.mxu0 0.0
        %1167 = vmatpush2.msra.mxu0 0.0
        %1168 = vmatprep.subr.mxu0 0.0
        %1169 = vmatpush2.msra.mxu0 0.0
        %1170 = vmatprep.subr.mxu0 0.0
        %1171 = vmatpush2.msra.mxu0 0.0
        %1172 = vmatprep.subr.mxu0 0.0
        %1173 = vmatpush2.msra.mxu0 0.0
        %1174 = vmatprep.subr.mxu0 0.0
        %1175 = vmatpush2.msra.mxu0 0.0
        %1176 = vmatprep.mubr.f32.mxu0 0.0
        %1177 = vmatmul.mubr.f32.gmra.mxu0 %v1110
        %v1178 = vpop.f32.mrf.mxu0
        %v1179 = vadd.f32 %v1108, %v1178
        %v1180 = vpop.f32.mrf.mxu0
        %1181 = vdwg.mxu0
        %v1182 = vadd.f32 %v279, %v1179
        %v1183 = vsel %vm308, %v1182, 0.0
        %1184 = vadd.xlane.f32.xlu0 %v1183
        %v1185 = vpop.xlane.xlu0 %1184
        %v1186 = vrcp.pop 32.0
        %v1187 = vmul.f32 %v1185, %v1186
        %v1188 = vsub.f32 %v1182, %v1187
        %v1189 = vmul.f32 %v1188, %v1188
        %v1190 = vsel %vm308, %v1189, 0.0
        %1191 = vadd.xlane.f32.xlu0 %v1190
        %v1192 = vpop.xlane.xlu0 %1191
        %v1193 = vmul.f32 %v1192, %v1186
        %v1194 = vadd.f32 %v1193, 1e-05
        %v1195 = vrsqrt.pop %v1194
        %v1196 = vmul.f32 %v1188, %v1195
        %v1197 = vlaneseq
        %v1198 = vshrl.u32 %v1197, 7
        %v1199 = vsub.s32 0, %v1198
        %v1200 = vrot.slane %v302, %v1199
        %v1201 = vmul.f32 %v1196, %v1200
        %v1202 = vlaneseq
        %v1203 = vshrl.u32 %v1202, 7
        %v1204 = vsub.s32 0, %v1203
        %v1205 = vrot.slane %v303, %v1204
        %v1206 = vadd.f32 %v1201, %v1205
        %v1207 = vlaneseq
        %v1208 = vshrl.u32 %v1207, 7
        %v1209 = vsub.s32 0, %v1208
        %v1210 = vrot.slane %v304, %v1209
        %1215 = vrot.lane.b32.xlu0 %v286, 96
        %v1216 = vpop.permute.xlu0 %1215
        %1217 = vrot.lane.b32.xlu0 %v287, 96
        %v1218 = vpop.permute.xlu0 %1217
        %1219 = vrot.lane.b32.xlu0 %v288, 96
        %v1220 = vpop.permute.xlu0 %1219
        %1221 = vrot.lane.b32.xlu0 %v289, 96
        %v1222 = vpop.permute.xlu0 %1221
        %v1228 = vsel %vm308, %v1206, 0
        %1230 = vmatprep.subr.mxu0 0.0
        %1231 = vmatpush1.msra.mxu0 0.0
        %1232 = vmatprep.subr.mxu0 0.0
        %1233 = vmatpush1.msra.mxu0 0.0
        %1234 = vmatprep.subr.mxu0 0.0
        %1235 = vmatpush1.msra.mxu0 0.0
        %1236 = vmatprep.subr.mxu0 0.0
        %1237 = vmatpush1.msra.mxu0 0.0
        %1238 = vmatprep.subr.mxu0 0.0
        %1239 = vmatpush1.msra.mxu0 0.0
        %1240 = vmatprep.subr.mxu0 0.0
        %1241 = vmatpush1.msra.mxu0 0.0
        %1242 = vmatprep.subr.mxu0 0.0
        %1243 = vmatpush1.msra.mxu0 0.0
        %1244 = vmatprep.subr.mxu0 0.0
        %1245 = vmatpush1.msra.mxu0 0.0
        %1246 = vmatprep.subr.mxu0 0.0
        %1247 = vmatpush1.msra.mxu0 0.0
        %1248 = vmatprep.subr.mxu0 0.0
        %1249 = vmatpush1.msra.mxu0 0.0
        %1250 = vmatprep.subr.mxu0 0.0
        %1251 = vmatpush1.msra.mxu0 0.0
        %1252 = vmatprep.subr.mxu0 0.0
        %1253 = vmatpush1.msra.mxu0 0.0
        %1254 = vmatprep.subr.mxu0 0.0
        %1255 = vmatpush1.msra.mxu0 %v1222
        %1256 = vmatprep.subr.mxu0 0.0
        %1257 = vmatpush1.msra.mxu0 %v1220
        %1258 = vmatprep.subr.mxu0 0.0
        %1259 = vmatpush1.msra.mxu0 %v1218
        %1260 = vmatprep.subr.mxu0 0.0
        %1261 = vmatpush1.msra.mxu0 %v1216
        %1262 = vmatprep.subr.mxu0 0.0
        %1263 = vmatpush2.msra.mxu0 0.0
        %1264 = vmatprep.subr.mxu0 0.0
        %1265 = vmatpush2.msra.mxu0 0.0
        %1266 = vmatprep.subr.mxu0 0.0
        %1267 = vmatpush2.msra.mxu0 0.0
        %1268 = vmatprep.subr.mxu0 0.0
        %1269 = vmatpush2.msra.mxu0 0.0
        %1270 = vmatprep.subr.mxu0 0.0
        %1271 = vmatpush2.msra.mxu0 0.0
        %1272 = vmatprep.subr.mxu0 0.0
        %1273 = vmatpush2.msra.mxu0 0.0
        %1274 = vmatprep.subr.mxu0 0.0
        %1275 = vmatpush2.msra.mxu0 0.0
        %1276 = vmatprep.subr.mxu0 0.0
        %1277 = vmatpush2.msra.mxu0 0.0
        %1278 = vmatprep.subr.mxu0 0.0
        %1279 = vmatpush2.msra.mxu0 0.0
        %1280 = vmatprep.subr.mxu0 0.0
        %1281 = vmatpush2.msra.mxu0 0.0
        %1282 = vmatprep.subr.mxu0 0.0
        %1283 = vmatpush2.msra.mxu0 0.0
        %1284 = vmatprep.subr.mxu0 0.0
        %1285 = vmatpush2.msra.mxu0 0.0
        %1286 = vmatprep.subr.mxu0 0.0
        %1287 = vmatpush2.msra.mxu0 0.0
        %1288 = vmatprep.subr.mxu0 0.0
        %1289 = vmatpush2.msra.mxu0 0.0
        %1290 = vmatprep.subr.mxu0 0.0
        %1291 = vmatpush2.msra.mxu0 0.0
        %1292 = vmatprep.subr.mxu0 0.0
        %1293 = vmatpush2.msra.mxu0 0.0
        %1294 = vmatprep.mubr.f32.mxu0 0.0
        %1295 = vmatmul.mubr.f32.gmra.mxu0 %v1228
        %v1296 = vpop.f32.mrf.mxu0
        %v1297 = vadd.f32 %v1210, %v1296
        %v1298 = vpop.f32.mrf.mxu0
        %1299 = vdwg.mxu0
        %v1300 = vmax.f32 %v1297, 0.0
        %v1301 = vlaneseq
        %v1302 = vshrl.u32 %v1301, 7
        %v1303 = vsub.s32 0, %v1302
        %v1304 = vrot.slane %v305, %v1303
        %vm1305 = vcmask 523264
        %v1307 = vsel %vm1305, %v1300, 0
        %1309 = vmatprep.subr.mxu0 0.0
        %1310 = vmatpush1.msra.mxu0 0.0
        %1311 = vmatprep.subr.mxu0 0.0
        %1312 = vmatpush1.msra.mxu0 0.0
        %1313 = vmatprep.subr.mxu0 0.0
        %1314 = vmatpush1.msra.mxu0 0.0
        %1315 = vmatprep.subr.mxu0 0.0
        %1316 = vmatpush1.msra.mxu0 0.0
        %1317 = vmatprep.subr.mxu0 0.0
        %1318 = vmatpush1.msra.mxu0 0.0
        %1319 = vmatprep.subr.mxu0 0.0
        %1320 = vmatpush1.msra.mxu0 0.0
        %1321 = vmatprep.subr.mxu0 0.0
        %1322 = vmatpush1.msra.mxu0 0.0
        %1323 = vmatprep.subr.mxu0 0.0
        %1324 = vmatpush1.msra.mxu0 0.0
        %1325 = vmatprep.subr.mxu0 0.0
        %1326 = vmatpush1.msra.mxu0 %v297
        %1327 = vmatprep.subr.mxu0 0.0
        %1328 = vmatpush1.msra.mxu0 %v296
        %1329 = vmatprep.subr.mxu0 0.0
        %1330 = vmatpush1.msra.mxu0 %v295
        %1331 = vmatprep.subr.mxu0 0.0
        %1332 = vmatpush1.msra.mxu0 %v294
        %1333 = vmatprep.subr.mxu0 0.0
        %1334 = vmatpush1.msra.mxu0 %v293
        %1335 = vmatprep.subr.mxu0 0.0
        %1336 = vmatpush1.msra.mxu0 %v292
        %1337 = vmatprep.subr.mxu0 0.0
        %1338 = vmatpush1.msra.mxu0 %v291
        %1339 = vmatprep.subr.mxu0 0.0
        %1340 = vmatpush1.msra.mxu0 %v290
        %1341 = vmatprep.subr.mxu0 0.0
        %1342 = vmatpush2.msra.mxu0 0.0
        %1343 = vmatprep.subr.mxu0 0.0
        %1344 = vmatpush2.msra.mxu0 0.0
        %1345 = vmatprep.subr.mxu0 0.0
        %1346 = vmatpush2.msra.mxu0 0.0
        %1347 = vmatprep.subr.mxu0 0.0
        %1348 = vmatpush2.msra.mxu0 0.0
        %1349 = vmatprep.subr.mxu0 0.0
        %1350 = vmatpush2.msra.mxu0 0.0
        %1351 = vmatprep.subr.mxu0 0.0
        %1352 = vmatpush2.msra.mxu0 0.0
        %1353 = vmatprep.subr.mxu0 0.0
        %1354 = vmatpush2.msra.mxu0 0.0
        %1355 = vmatprep.subr.mxu0 0.0
        %1356 = vmatpush2.msra.mxu0 0.0
        %1357 = vmatprep.subr.mxu0 0.0
        %1358 = vmatpush2.msra.mxu0 0.0
        %1359 = vmatprep.subr.mxu0 0.0
        %1360 = vmatpush2.msra.mxu0 0.0
        %1361 = vmatprep.subr.mxu0 0.0
        %1362 = vmatpush2.msra.mxu0 0.0
        %1363 = vmatprep.subr.mxu0 0.0
        %1364 = vmatpush2.msra.mxu0 0.0
        %1365 = vmatprep.subr.mxu0 0.0
        %1366 = vmatpush2.msra.mxu0 0.0
        %1367 = vmatprep.subr.mxu0 0.0
        %1368 = vmatpush2.msra.mxu0 0.0
        %1369 = vmatprep.subr.mxu0 0.0
        %1370 = vmatpush2.msra.mxu0 0.0
        %1371 = vmatprep.subr.mxu0 0.0
        %1372 = vmatpush2.msra.mxu0 0.0
        %1373 = vmatprep.mubr.f32.mxu0 0.0
        %1374 = vmatmul.mubr.f32.gmra.mxu0 %v1307
        %v1375 = vpop.f32.mrf.mxu0
        %v1376 = vadd.f32 %v1304, %v1375
        %v1377 = vpop.f32.mrf.mxu0
        %1378 = vdwg.mxu0
        %v1379 = vadd.f32 %v1206, %v1376
        %v1380 = vsel %vm308, %v1379, 0.0
        %1381 = vadd.xlane.f32.xlu0 %v1380
        %v1382 = vpop.xlane.xlu0 %1381
        %v1383 = vmul.f32 %v1382, %v1186
        %v1384 = vsub.f32 %v1379, %v1383
        %v1385 = vmul.f32 %v1384, %v1384
        %v1386 = vsel %vm308, %v1385, 0.0
        %1387 = vadd.xlane.f32.xlu0 %v1386
        %v1388 = vpop.xlane.xlu0 %1387
        %v1389 = vmul.f32 %v1388, %v1186
        %v1390 = vadd.f32 %v1389, 1e-05
        %v1391 = vrsqrt.pop %v1390
        %v1392 = vmul.f32 %v1384, %v1391
        %v1393 = vlaneseq
        %v1394 = vshrl.u32 %v1393, 7
        %v1395 = vsub.s32 0, %v1394
        %v1396 = vrot.slane %v306, %v1395
        %v1397 = vmul.f32 %v1392, %v1396
        %v1398 = vlaneseq
        %v1399 = vshrl.u32 %v1398, 7
        %v1400 = vsub.s32 0, %v1399
        %v1401 = vrot.slane %v307, %v1400
        %v1402 = vadd.f32 %v1397, %v1401
        %1403 = vst.msk [vmem:[%s278] sm:$0xff] %vm308, %v1402
        %s1404 = sand.u32 %s127, 1
        %s1405 = scalar_lea.sflag [#allocation4], %s1404
        %s1406 = sand.u32 %s127, 1
        %s1407 = smul.addr %s1406, 8
        %s1408 = scalar_lea.vmem [#allocation10], %s1407
        // Predicated region
        $region53: #{tpu_custom_call.1} parent=35 // pred_check
          %p1409 = pneg %p137
        $region54: #{tpu_custom_call.1} parent=35 // pred_check_branch
          %1411 = sbr.rel (%p1409) target = $region56
        $region55: #{tpu_custom_call.1} parent=35 // pred_region
          %s1413 = ssub.s32 128, 128
          %1414 = vsyncadd %s1405, %s1413
          %s1415 = smul.addr %s25, 128
          %s1416 = scalar_lea.hbm %s4, %s1415
          %s1418 = sshll.u32 %s1408, 4
          %s1419 = int_to_ptr.vmem [resolvable:$true] %s1418
          %1421 = dma.vmem_to_hbm [thread:$0]  %s1419, 128, %s1416, %s1405
        $region56: #{tpu_custom_call.1} parent=35 // pred_fallthru
          _
      $region36: #{tpu_custom_call.1} parent=5 // pred_fallthru
        _
      %p1422 = scmp.le.s32.totalorder 2, %s20
      // Predicated region
      $region57: #{tpu_custom_call.1} parent=5 // pred_check
        %p1423 = pneg %p1422
      $region58: #{tpu_custom_call.1} parent=5 // pred_check_branch
        %1425 = sbr.rel (%p1423) target = $region60
      $region59: #{tpu_custom_call.1} parent=5 // pred_region
        %s1426 = ssub.s32 %s20, 2
        // Predicated region
        $region61: #{tpu_custom_call.1} parent=59 // pred_check
          %p1427 = pneg %p143
        $region62: #{tpu_custom_call.1} parent=59 // pred_check_branch
          %1429 = sbr.rel (%p1427) target = $region64
        $region63: #{tpu_custom_call.1} parent=59 // pred_region
          %s1430 = sand.u32 %s128, 1
          %s1431 = scalar_lea.sflag [#allocation4], %s1430
          %s1432 = sand.u32 %s128, 1
          %s1433 = smul.addr %s1432, 8
          %s1434 = scalar_lea.vmem [#allocation10], %s1433
          %1435 = dma.done %s1431, 128
        $region64: #{tpu_custom_call.1} parent=59 // pred_fallthru
          _
      $region60: #{tpu_custom_call.1} parent=5 // pred_fallthru
        _
    $region6: #{tpu_custom_call.1} parent=1 // loop_footer
      %s24 = sadd.s32 1, %s20
    $region7: #{tpu_custom_call.1} parent=1 // loop_footer_branch
      %19 = sbr.rel target = $region3
    $region8: #{tpu_custom_call.1} parent=1 // loop_exit
      _
    %1436 = vsyncpa [#allocation3], 1
    %s1437 = scalar_lea.sflag [#allocation3], 1
    %1438 = vsyncpa %s1437, 1
    %1439 = vsyncpa [#allocation6], 1
    %s1440 = scalar_lea.sflag [#allocation6], 1
    %1441 = vsyncpa %s1440, 1
    %1442 = vsyncpa [#allocation9], 1
    %1443 = vsyncpa [#allocation4], 1
    %s1444 = scalar_lea.sflag [#allocation4], 1
    %1445 = vsyncpa %s1444, 1

</llo_original>
